<compile_context>
chip_gen: v5e
topology: v5e:2x2
jax: 0.10.0
libtpu: 0.0.40
codegen_flags: <defaults>
</compile_context>

<pallas_src>
import jax
import jax.numpy as jnp
import numpy as np
from jax import lax
from jax.experimental import pallas as pl
from jax.experimental.pallas import tpu as pltpu

# ----- config (small, deterministic) -----
VOCAB = 100
VOCAB_PAD = 128     # pad vocab to one full lane tile
EMB = 32
HID = 32
ATTN = 16
N_FCS = 2
LABELS = 3
OUT_PAD = 128       # lane-dense final store; wrapper slices back to LABELS
SEQ = 8
BATCH = 2


# ---------------- fused Pallas kernel ----------------

def fused_kernel(tok_ref, emb_ref, wt_ref, bt_ref, wih_ref, whh_ref, bg_ref,
                 ws_ref, wa_ref, win_ref, bin_ref, wfc_ref, bfc_ref,
                 wout_ref, bout_ref, out_ref):
    """Whole Attn_encoder_snli forward for both sentences (stacked batch)."""
    rows = tok_ref.shape[0]          # S * TB (time-major, x0 batch then x1 batch)
    H = whh_ref.shape[-1]
    B = out_ref.shape[0]
    TB = 2 * B
    S = rows // TB
    V = emb_ref.shape[0]             # padded vocab (one lane tile)

    # ---- embedding lookup as one-hot @ table (padding row 0 is zero) ----
    tok = tok_ref[...]                                               # [S*TB, 1] int32
    onehot = (lax.broadcasted_iota(jnp.int32, (rows, V), 1) == tok
              ).astype(jnp.float32)                                  # [S*TB, V]
    emb = jnp.dot(onehot, emb_ref[...], preferred_element_type=jnp.float32)

    # ---- translate + ReLU ----
    x = jnp.maximum(
        jnp.dot(emb, wt_ref[...], preferred_element_type=jnp.float32)
        + bt_ref[...], 0.0)                                          # [S*TB, H]

    # ---- per-gate input projections, hoisted out of the recurrence ----
    # gate order i, f, g, o; each gx[k] is (S, TB, H) so in-loop access is a
    # leading-axis index (no lane slicing on the serial path).
    wih = wih_ref[...]                                               # (4, H, H)
    bg = bg_ref[...]                                                 # (4, 1, H)
    gx = [(jnp.dot(x, wih[k], preferred_element_type=jnp.float32) + bg[k]
           ).reshape(S, TB, H) for k in range(4)]

    whh = whh_ref[...]                                               # (4, H, H)
    whh_i, whh_f, whh_g, whh_o = whh[0], whh[1], whh[2], whh[3]

    # ---- LSTM recurrence, statically unrolled; h states stay in vregs ----
    h = jnp.zeros((TB, H), jnp.float32)
    c = jnp.zeros((TB, H), jnp.float32)
    hs = []
    for t in range(S):                                               # S static, tiny
        i_g = jax.nn.sigmoid(gx[0][t] + jnp.dot(h, whh_i,
                                                preferred_element_type=jnp.float32))
        f_g = jax.nn.sigmoid(gx[1][t] + jnp.dot(h, whh_f,
                                                preferred_element_type=jnp.float32))
        g_g = jnp.tanh(gx[2][t] + jnp.dot(h, whh_g,
                                          preferred_element_type=jnp.float32))
        o_g = jax.nn.sigmoid(gx[3][t] + jnp.dot(h, whh_o,
                                                preferred_element_type=jnp.float32))
        c = f_g * c + i_g * g_g
        h = o_g * jnp.tanh(c)
        hs.append(h)

    allh3 = jnp.stack(hs, axis=0)                                    # (S, TB, H)
    allh2 = allh3.reshape(S * TB, H)

    # ---- attention over the sequence axis (F.softmax default dim=0) ----
    t_act = jnp.tanh(jnp.dot(allh2, ws_ref[...],
                             preferred_element_type=jnp.float32))    # [S*TB, A]
    # score = <tanh(h Ws), wa> as a VPU multiply + lane reduce (no N=1 MXU op)
    sc = jnp.sum(t_act * wa_ref[...], axis=-1, keepdims=True
                 ).reshape(S, TB, 1)                                 # [S, TB, 1]
    m = jnp.max(sc, axis=0, keepdims=True)
    e = jnp.exp(sc - m)
    denom = jnp.sum(e, axis=0, keepdims=True)
    attn = e * pl.reciprocal(denom, approx=True)                     # [S, TB, 1]

    # context = bmm(all_.permute(1,2,0), attn.permute(1,0,2)) -> [TB, H]
    cont = jnp.sum(allh3 * attn, axis=0)

    # ---- classification head on the two stacked encodings ----
    x0e = cont[0:B]
    x1e = cont[B:TB]
    feats = jnp.concatenate([x0e, x1e, jnp.abs(x0e - x1e), x0e * x1e],
                            axis=-1)                                 # [B, 4H]
    opt = (jnp.dot(feats, win_ref[...], preferred_element_type=jnp.float32)
           + bin_ref[...])
    wfc = wfc_ref[...]
    bfc = bfc_ref[...]
    for i in range(wfc_ref.shape[0]):                                # static unroll
        opt = jnp.maximum(
            jnp.dot(opt, wfc[i], preferred_element_type=jnp.float32) + bfc[i], 0.0)
    out_ref[...] = (jnp.dot(opt, wout_ref[...],
                            preferred_element_type=jnp.float32) + bout_ref[...])


# ---------------- wrapper ----------------

_VMEM = pl.BlockSpec(memory_space=pltpu.MemorySpace.VMEM)


def _prep_params(p):
    """Re-layout natural params into kernel-friendly shapes (cheap, traced)."""
    emb_pad = jnp.zeros((VOCAB_PAD, EMB), jnp.float32).at[:VOCAB, :].set(p["embedding"])
    # split [H, 4H] (i|f|g|o) into per-gate (4, H, H) blocks
    w_ih4 = jnp.transpose(p["w_ih"].reshape(HID, 4, HID), (1, 0, 2))
    w_hh4 = jnp.transpose(p["w_hh"].reshape(HID, 4, HID), (1, 0, 2))
    b_g4 = p["b_g"].reshape(4, 1, HID)
    wa_row = p["w_a"].reshape(1, ATTN)
    w_out_pad = jnp.zeros((HID, OUT_PAD), jnp.float32).at[:, :LABELS].set(p["w_out"])
    b_out_pad = jnp.zeros((1, OUT_PAD), jnp.float32).at[:, :LABELS].set(p["b_out"])
    return (emb_pad, p["w_t"], p["b_t"], w_ih4, w_hh4, b_g4, p["w_s"], wa_row,
            p["w_in"], p["b_in"], p["w_fcs"], p["b_fcs"], w_out_pad, b_out_pad)


@jax.jit
def attn_encoder_snli(x0, x1, p):
    """Full forward for both sentences in a single fused pallas_call."""
    B, S = x0.shape
    TB = 2 * B
    # time-major stacked token ids; row order (t, b) with b = [x0 batch | x1 batch]
    tok = jnp.transpose(jnp.concatenate([x0, x1], axis=0)
                        ).reshape(S * TB, 1).astype(jnp.int32)
    prepped = _prep_params(p)
    out = pl.pallas_call(
        fused_kernel,
        out_shape=jax.ShapeDtypeStruct((B, OUT_PAD), jnp.float32),
        in_specs=[_VMEM] * 15,
        out_specs=_VMEM,
    )(tok, *prepped)
    return out[None, :, :LABELS]               # [1, B, LABELS] like torch


# ---------------- pure-JAX reference (silent sanity check) ----------------

def _ref_encoder(tokens, p):
    emb = jnp.take(p["embedding"], tokens, axis=0)          # [B, S, E]
    x = jax.nn.relu(emb @ p["w_t"] + p["b_t"][0])           # [B, S, H]
    x = jnp.transpose(x, (1, 0, 2))                         # [S, B, H]
    B = tokens.shape[0]

    def step(carry, xt):
        h, c = carry
        gates = xt @ p["w_ih"] + h @ p["w_hh"] + p["b_g"][0]
        i_g = jax.nn.sigmoid(gates[:, :HID])
        f_g = jax.nn.sigmoid(gates[:, HID:2 * HID])
        g_g = jnp.tanh(gates[:, 2 * HID:3 * HID])
        o_g = jax.nn.sigmoid(gates[:, 3 * HID:])
        c = f_g * c + i_g * g_g
        h = o_g * jnp.tanh(c)
        return (h, c), h

    h0 = jnp.zeros((B, HID), jnp.float32)
    _, allh = lax.scan(step, (h0, h0), x)                   # [S, B, H]
    scores = jnp.tanh(allh @ p["w_s"]) @ p["w_a"]           # [S, B, 1]
    attn = jax.nn.softmax(scores, axis=0)
    return jnp.sum(allh * attn, axis=0)                     # [B, H]


def _ref_forward(x0, x1, p):
    a = _ref_encoder(x0, p)
    b = _ref_encoder(x1, p)
    cont = jnp.concatenate([a, b, jnp.abs(a - b), a * b], axis=-1)
    opt = cont @ p["w_in"] + p["b_in"][0]
    for i in range(N_FCS):
        opt = jax.nn.relu(opt @ p["w_fcs"][i] + p["b_fcs"][i][0])
    return (opt @ p["w_out"] + p["b_out"][0])[None, :, :]


# ---------------- params / main ----------------

def make_params(key):
    ks = jax.random.split(key, 16)
    s = 0.1
    emb = s * jax.random.normal(ks[0], (VOCAB, EMB), jnp.float32)
    emb = emb.at[0].set(0.0)                                # padding_idx=0
    return {
        "embedding": emb,
        "w_t": s * jax.random.normal(ks[1], (EMB, HID), jnp.float32),
        "b_t": s * jax.random.normal(ks[2], (1, HID), jnp.float32),
        "w_ih": s * jax.random.normal(ks[3], (HID, 4 * HID), jnp.float32),
        "w_hh": s * jax.random.normal(ks[4], (HID, 4 * HID), jnp.float32),
        "b_g": s * jax.random.normal(ks[5], (1, 4 * HID), jnp.float32),  # b_ih + b_hh
        "w_s": s * jax.random.normal(ks[6], (HID, ATTN), jnp.float32),
        "w_a": s * jax.random.normal(ks[7], (ATTN, 1), jnp.float32),
        "w_in": s * jax.random.normal(ks[8], (4 * HID, HID), jnp.float32),
        "b_in": s * jax.random.normal(ks[9], (1, HID), jnp.float32),
        "w_fcs": s * jax.random.normal(ks[10], (N_FCS, HID, HID), jnp.float32),
        "b_fcs": s * jax.random.normal(ks[11], (N_FCS, 1, HID), jnp.float32),
        "w_out": s * jax.random.normal(ks[12], (HID, LABELS), jnp.float32),
        "b_out": s * jax.random.normal(ks[13], (1, LABELS), jnp.float32),
    }


if __name__ == "__main__":
    key = jax.random.PRNGKey(0)
    kp, k0, k1 = jax.random.split(key, 3)
    params = make_params(kp)
    x0 = jax.random.randint(k0, (BATCH, SEQ), 0, VOCAB, dtype=jnp.int32)
    x1 = jax.random.randint(k1, (BATCH, SEQ), 0, VOCAB, dtype=jnp.int32)

    out = jax.block_until_ready(attn_encoder_snli(x0, x1, params))
    ref = jax.block_until_ready(_ref_forward(x0, x1, params))

    assert out.shape == (1, BATCH, LABELS), out.shape
    np.testing.assert_allclose(np.asarray(out), np.asarray(ref), rtol=1e-3, atol=1e-3)
    print("KERNEL_OK")
</pallas_src>

<mosaic_0001>
module attributes {stable_mosaic.version = 11 : i64} {
  func.func @fused_kernel(%arg0: memref<32x1xi32, #tpu.memory_space<vmem>>, %arg1: memref<128x32xf32, #tpu.memory_space<vmem>>, %arg2: memref<32x32xf32, #tpu.memory_space<vmem>>, %arg3: memref<1x32xf32, #tpu.memory_space<vmem>>, %arg4: memref<4x32x32xf32, #tpu.memory_space<vmem>>, %arg5: memref<4x32x32xf32, #tpu.memory_space<vmem>>, %arg6: memref<4x1x32xf32, #tpu.memory_space<vmem>>, %arg7: memref<32x16xf32, #tpu.memory_space<vmem>>, %arg8: memref<1x16xf32, #tpu.memory_space<vmem>>, %arg9: memref<128x32xf32, #tpu.memory_space<vmem>>, %arg10: memref<1x32xf32, #tpu.memory_space<vmem>>, %arg11: memref<2x32x32xf32, #tpu.memory_space<vmem>>, %arg12: memref<2x1x32xf32, #tpu.memory_space<vmem>>, %arg13: memref<32x128xf32, #tpu.memory_space<vmem>>, %arg14: memref<1x128xf32, #tpu.memory_space<vmem>>, %arg15: memref<2x128xf32, #tpu.memory_space<vmem>>) attributes {dimension_semantics = [], scalar_prefetch = 0 : i64, scratch_operands = 0 : i64, tpu.core_type = #tpu.core_type<tc>} {
    %c0 = arith.constant 0 : index
    %c0_0 = arith.constant 0 : index
    %0 = vector.load %arg0[%c0, %c0_0] : memref<32x1xi32, #tpu.memory_space<vmem>>, vector<32x1xi32>
    %1 = tpu.iota {dimensions = array<i32: 1>} : vector<32x128xi32>
    %2 = vector.broadcast %0 : vector<32x1xi32> to vector<32x128xi32>
    %3 = arith.cmpi eq, %1, %2 : vector<32x128xi32>
    %4 = arith.extui %3 : vector<32x128xi1> to vector<32x128xi32>
    %5 = arith.sitofp %4 : vector<32x128xi32> to vector<32x128xf32>
    %c0_1 = arith.constant 0 : index
    %c0_2 = arith.constant 0 : index
    %6 = vector.load %arg1[%c0_1, %c0_2] : memref<128x32xf32, #tpu.memory_space<vmem>>, vector<128x32xf32>
    %cst = arith.constant dense<0.000000e+00> : vector<32x32xf32>
    %7 = tpu.matmul %5, %6, %cst {dimension_numbers = #tpu.dot_dimension_numbers<[1], [0], [0], [1], [0, 0, 1, 1], [], []>} : vector<32x128xf32>, vector<128x32xf32>, vector<32x32xf32> -> vector<32x32xf32>
    %c0_3 = arith.constant 0 : index
    %c0_4 = arith.constant 0 : index
    %8 = vector.load %arg2[%c0_3, %c0_4] : memref<32x32xf32, #tpu.memory_space<vmem>>, vector<32x32xf32>
    %cst_5 = arith.constant dense<0.000000e+00> : vector<32x32xf32>
    %9 = tpu.matmul %7, %8, %cst_5 {dimension_numbers = #tpu.dot_dimension_numbers<[1], [0], [0], [1], [0, 0, 1, 1], [], []>} : vector<32x32xf32>, vector<32x32xf32>, vector<32x32xf32> -> vector<32x32xf32>
    %c0_6 = arith.constant 0 : index
    %c0_7 = arith.constant 0 : index
    %10 = vector.load %arg3[%c0_6, %c0_7] : memref<1x32xf32, #tpu.memory_space<vmem>>, vector<1x32xf32>
    %11 = vector.broadcast %10 : vector<1x32xf32> to vector<32x32xf32>
    %12 = arith.addf %9, %11 : vector<32x32xf32>
    %cst_8 = arith.constant 0.000000e+00 : f32
    %13 = vector.broadcast %cst_8 : f32 to vector<32x32xf32>
    %14 = arith.maximumf %12, %13 : vector<32x32xf32>
    %c0_9 = arith.constant 0 : index
    %c0_10 = arith.constant 0 : index
    %c0_11 = arith.constant 0 : index
    %15 = vector.load %arg4[%c0_9, %c0_10, %c0_11] : memref<4x32x32xf32, #tpu.memory_space<vmem>>, vector<4x32x32xf32>
    %c0_12 = arith.constant 0 : index
    %c0_13 = arith.constant 0 : index
    %c0_14 = arith.constant 0 : index
    %16 = vector.load %arg6[%c0_12, %c0_13, %c0_14] : memref<4x1x32xf32, #tpu.memory_space<vmem>>, vector<4x1x32xf32>
    %17 = vector.extract_strided_slice %15 {offsets = [0, 0, 0], sizes = [1, 32, 32], strides = [1, 1, 1]} : vector<4x32x32xf32> to vector<1x32x32xf32>
    %18 = vector.shape_cast %17 : vector<1x32x32xf32> to vector<32x32xf32>
    %cst_15 = arith.constant dense<0.000000e+00> : vector<32x32xf32>
    %19 = tpu.matmul %14, %18, %cst_15 {dimension_numbers = #tpu.dot_dimension_numbers<[1], [0], [0], [1], [0, 0, 1, 1], [], []>} : vector<32x32xf32>, vector<32x32xf32>, vector<32x32xf32> -> vector<32x32xf32>
    %20 = vector.extract_strided_slice %16 {offsets = [0, 0, 0], sizes = [1, 1, 32], strides = [1, 1, 1]} : vector<4x1x32xf32> to vector<1x1x32xf32>
    %21 = vector.shape_cast %20 : vector<1x1x32xf32> to vector<1x32xf32>
    %22 = vector.broadcast %21 : vector<1x32xf32> to vector<32x32xf32>
    %23 = arith.addf %19, %22 : vector<32x32xf32>
    %24 = vector.shape_cast %23 : vector<32x32xf32> to vector<8x4x32xf32>
    %25 = vector.extract_strided_slice %15 {offsets = [1, 0, 0], sizes = [1, 32, 32], strides = [1, 1, 1]} : vector<4x32x32xf32> to vector<1x32x32xf32>
    %26 = vector.shape_cast %25 : vector<1x32x32xf32> to vector<32x32xf32>
    %cst_16 = arith.constant dense<0.000000e+00> : vector<32x32xf32>
    %27 = tpu.matmul %14, %26, %cst_16 {dimension_numbers = #tpu.dot_dimension_numbers<[1], [0], [0], [1], [0, 0, 1, 1], [], []>} : vector<32x32xf32>, vector<32x32xf32>, vector<32x32xf32> -> vector<32x32xf32>
    %28 = vector.extract_strided_slice %16 {offsets = [1, 0, 0], sizes = [1, 1, 32], strides = [1, 1, 1]} : vector<4x1x32xf32> to vector<1x1x32xf32>
    %29 = vector.shape_cast %28 : vector<1x1x32xf32> to vector<1x32xf32>
    %30 = vector.broadcast %29 : vector<1x32xf32> to vector<32x32xf32>
    %31 = arith.addf %27, %30 : vector<32x32xf32>
    %32 = vector.shape_cast %31 : vector<32x32xf32> to vector<8x4x32xf32>
    %33 = vector.extract_strided_slice %15 {offsets = [2, 0, 0], sizes = [1, 32, 32], strides = [1, 1, 1]} : vector<4x32x32xf32> to vector<1x32x32xf32>
    %34 = vector.shape_cast %33 : vector<1x32x32xf32> to vector<32x32xf32>
    %cst_17 = arith.constant dense<0.000000e+00> : vector<32x32xf32>
    %35 = tpu.matmul %14, %34, %cst_17 {dimension_numbers = #tpu.dot_dimension_numbers<[1], [0], [0], [1], [0, 0, 1, 1], [], []>} : vector<32x32xf32>, vector<32x32xf32>, vector<32x32xf32> -> vector<32x32xf32>
    %36 = vector.extract_strided_slice %16 {offsets = [2, 0, 0], sizes = [1, 1, 32], strides = [1, 1, 1]} : vector<4x1x32xf32> to vector<1x1x32xf32>
    %37 = vector.shape_cast %36 : vector<1x1x32xf32> to vector<1x32xf32>
    %38 = vector.broadcast %37 : vector<1x32xf32> to vector<32x32xf32>
    %39 = arith.addf %35, %38 : vector<32x32xf32>
    %40 = vector.shape_cast %39 : vector<32x32xf32> to vector<8x4x32xf32>
    %41 = vector.extract_strided_slice %15 {offsets = [3, 0, 0], sizes = [1, 32, 32], strides = [1, 1, 1]} : vector<4x32x32xf32> to vector<1x32x32xf32>
    %42 = vector.shape_cast %41 : vector<1x32x32xf32> to vector<32x32xf32>
    %cst_18 = arith.constant dense<0.000000e+00> : vector<32x32xf32>
    %43 = tpu.matmul %14, %42, %cst_18 {dimension_numbers = #tpu.dot_dimension_numbers<[1], [0], [0], [1], [0, 0, 1, 1], [], []>} : vector<32x32xf32>, vector<32x32xf32>, vector<32x32xf32> -> vector<32x32xf32>
    %44 = vector.extract_strided_slice %16 {offsets = [3, 0, 0], sizes = [1, 1, 32], strides = [1, 1, 1]} : vector<4x1x32xf32> to vector<1x1x32xf32>
    %45 = vector.shape_cast %44 : vector<1x1x32xf32> to vector<1x32xf32>
    %46 = vector.broadcast %45 : vector<1x32xf32> to vector<32x32xf32>
    %47 = arith.addf %43, %46 : vector<32x32xf32>
    %48 = vector.shape_cast %47 : vector<32x32xf32> to vector<8x4x32xf32>
    %c0_19 = arith.constant 0 : index
    %c0_20 = arith.constant 0 : index
    %c0_21 = arith.constant 0 : index
    %49 = vector.load %arg5[%c0_19, %c0_20, %c0_21] : memref<4x32x32xf32, #tpu.memory_space<vmem>>, vector<4x32x32xf32>
    %50 = vector.extract_strided_slice %49 {offsets = [0, 0, 0], sizes = [1, 32, 32], strides = [1, 1, 1]} : vector<4x32x32xf32> to vector<1x32x32xf32>
    %51 = vector.shape_cast %50 : vector<1x32x32xf32> to vector<32x32xf32>
    %52 = vector.extract_strided_slice %49 {offsets = [1, 0, 0], sizes = [1, 32, 32], strides = [1, 1, 1]} : vector<4x32x32xf32> to vector<1x32x32xf32>
    %53 = vector.shape_cast %52 : vector<1x32x32xf32> to vector<32x32xf32>
    %54 = vector.extract_strided_slice %49 {offsets = [2, 0, 0], sizes = [1, 32, 32], strides = [1, 1, 1]} : vector<4x32x32xf32> to vector<1x32x32xf32>
    %55 = vector.shape_cast %54 : vector<1x32x32xf32> to vector<32x32xf32>
    %56 = vector.extract_strided_slice %49 {offsets = [3, 0, 0], sizes = [1, 32, 32], strides = [1, 1, 1]} : vector<4x32x32xf32> to vector<1x32x32xf32>
    %57 = vector.shape_cast %56 : vector<1x32x32xf32> to vector<32x32xf32>
    %cst_22 = arith.constant 0.000000e+00 : f32
    %58 = vector.broadcast %cst_22 : f32 to vector<4x32xf32>
    %cst_23 = arith.constant 0.000000e+00 : f32
    %59 = vector.broadcast %cst_23 : f32 to vector<4x32xf32>
    %60 = vector.extract_strided_slice %24 {offsets = [0, 0, 0], sizes = [1, 4, 32], strides = [1, 1, 1]} : vector<8x4x32xf32> to vector<1x4x32xf32>
    %61 = vector.shape_cast %60 : vector<1x4x32xf32> to vector<4x32xf32>
    %cst_24 = arith.constant dense<0.000000e+00> : vector<4x32xf32>
    %62 = tpu.matmul %58, %51, %cst_24 {dimension_numbers = #tpu.dot_dimension_numbers<[1], [0], [0], [1], [0, 0, 1, 1], [], []>} : vector<4x32xf32>, vector<32x32xf32>, vector<4x32xf32> -> vector<4x32xf32>
    %63 = arith.addf %61, %62 : vector<4x32xf32>
    %64 = arith.negf %63 : vector<4x32xf32>
    %65 = math.exp %64 : vector<4x32xf32>
    %cst_25 = arith.constant 1.000000e+00 : f32
    %66 = vector.broadcast %cst_25 : f32 to vector<4x32xf32>
    %67 = arith.addf %66, %65 : vector<4x32xf32>
    %68 = arith.divf %66, %67 : vector<4x32xf32>
    %69 = vector.extract_strided_slice %32 {offsets = [0, 0, 0], sizes = [1, 4, 32], strides = [1, 1, 1]} : vector<8x4x32xf32> to vector<1x4x32xf32>
    %70 = vector.shape_cast %69 : vector<1x4x32xf32> to vector<4x32xf32>
    %cst_26 = arith.constant dense<0.000000e+00> : vector<4x32xf32>
    %71 = tpu.matmul %58, %53, %cst_26 {dimension_numbers = #tpu.dot_dimension_numbers<[1], [0], [0], [1], [0, 0, 1, 1], [], []>} : vector<4x32xf32>, vector<32x32xf32>, vector<4x32xf32> -> vector<4x32xf32>
    %72 = arith.addf %70, %71 : vector<4x32xf32>
    %73 = arith.negf %72 : vector<4x32xf32>
    %74 = math.exp %73 : vector<4x32xf32>
    %cst_27 = arith.constant 1.000000e+00 : f32
    %75 = vector.broadcast %cst_27 : f32 to vector<4x32xf32>
    %76 = arith.addf %75, %74 : vector<4x32xf32>
    %77 = arith.divf %75, %76 : vector<4x32xf32>
    %78 = vector.extract_strided_slice %40 {offsets = [0, 0, 0], sizes = [1, 4, 32], strides = [1, 1, 1]} : vector<8x4x32xf32> to vector<1x4x32xf32>
    %79 = vector.shape_cast %78 : vector<1x4x32xf32> to vector<4x32xf32>
    %cst_28 = arith.constant dense<0.000000e+00> : vector<4x32xf32>
    %80 = tpu.matmul %58, %55, %cst_28 {dimension_numbers = #tpu.dot_dimension_numbers<[1], [0], [0], [1], [0, 0, 1, 1], [], []>} : vector<4x32xf32>, vector<32x32xf32>, vector<4x32xf32> -> vector<4x32xf32>
    %81 = arith.addf %79, %80 : vector<4x32xf32>
    %82 = math.tanh %81 : vector<4x32xf32>
    %83 = vector.extract_strided_slice %48 {offsets = [0, 0, 0], sizes = [1, 4, 32], strides = [1, 1, 1]} : vector<8x4x32xf32> to vector<1x4x32xf32>
    %84 = vector.shape_cast %83 : vector<1x4x32xf32> to vector<4x32xf32>
    %cst_29 = arith.constant dense<0.000000e+00> : vector<4x32xf32>
    %85 = tpu.matmul %58, %57, %cst_29 {dimension_numbers = #tpu.dot_dimension_numbers<[1], [0], [0], [1], [0, 0, 1, 1], [], []>} : vector<4x32xf32>, vector<32x32xf32>, vector<4x32xf32> -> vector<4x32xf32>
    %86 = arith.addf %84, %85 : vector<4x32xf32>
    %87 = arith.negf %86 : vector<4x32xf32>
    %88 = math.exp %87 : vector<4x32xf32>
    %cst_30 = arith.constant 1.000000e+00 : f32
    %89 = vector.broadcast %cst_30 : f32 to vector<4x32xf32>
    %90 = arith.addf %89, %88 : vector<4x32xf32>
    %91 = arith.divf %89, %90 : vector<4x32xf32>
    %92 = arith.mulf %77, %59 : vector<4x32xf32>
    %93 = arith.mulf %68, %82 : vector<4x32xf32>
    %94 = arith.addf %92, %93 : vector<4x32xf32>
    %95 = math.tanh %94 : vector<4x32xf32>
    %96 = arith.mulf %91, %95 : vector<4x32xf32>
    %97 = vector.extract_strided_slice %24 {offsets = [1, 0, 0], sizes = [1, 4, 32], strides = [1, 1, 1]} : vector<8x4x32xf32> to vector<1x4x32xf32>
    %98 = vector.shape_cast %97 : vector<1x4x32xf32> to vector<4x32xf32>
    %cst_31 = arith.constant dense<0.000000e+00> : vector<4x32xf32>
    %99 = tpu.matmul %96, %51, %cst_31 {dimension_numbers = #tpu.dot_dimension_numbers<[1], [0], [0], [1], [0, 0, 1, 1], [], []>} : vector<4x32xf32>, vector<32x32xf32>, vector<4x32xf32> -> vector<4x32xf32>
    %100 = arith.addf %98, %99 : vector<4x32xf32>
    %101 = arith.negf %100 : vector<4x32xf32>
    %102 = math.exp %101 : vector<4x32xf32>
    %cst_32 = arith.constant 1.000000e+00 : f32
    %103 = vector.broadcast %cst_32 : f32 to vector<4x32xf32>
    %104 = arith.addf %103, %102 : vector<4x32xf32>
    %105 = arith.divf %103, %104 : vector<4x32xf32>
    %106 = vector.extract_strided_slice %32 {offsets = [1, 0, 0], sizes = [1, 4, 32], strides = [1, 1, 1]} : vector<8x4x32xf32> to vector<1x4x32xf32>
    %107 = vector.shape_cast %106 : vector<1x4x32xf32> to vector<4x32xf32>
    %cst_33 = arith.constant dense<0.000000e+00> : vector<4x32xf32>
    %108 = tpu.matmul %96, %53, %cst_33 {dimension_numbers = #tpu.dot_dimension_numbers<[1], [0], [0], [1], [0, 0, 1, 1], [], []>} : vector<4x32xf32>, vector<32x32xf32>, vector<4x32xf32> -> vector<4x32xf32>
    %109 = arith.addf %107, %108 : vector<4x32xf32>
    %110 = arith.negf %109 : vector<4x32xf32>
    %111 = math.exp %110 : vector<4x32xf32>
    %cst_34 = arith.constant 1.000000e+00 : f32
    %112 = vector.broadcast %cst_34 : f32 to vector<4x32xf32>
    %113 = arith.addf %112, %111 : vector<4x32xf32>
    %114 = arith.divf %112, %113 : vector<4x32xf32>
    %115 = vector.extract_strided_slice %40 {offsets = [1, 0, 0], sizes = [1, 4, 32], strides = [1, 1, 1]} : vector<8x4x32xf32> to vector<1x4x32xf32>
    %116 = vector.shape_cast %115 : vector<1x4x32xf32> to vector<4x32xf32>
    %cst_35 = arith.constant dense<0.000000e+00> : vector<4x32xf32>
    %117 = tpu.matmul %96, %55, %cst_35 {dimension_numbers = #tpu.dot_dimension_numbers<[1], [0], [0], [1], [0, 0, 1, 1], [], []>} : vector<4x32xf32>, vector<32x32xf32>, vector<4x32xf32> -> vector<4x32xf32>
    %118 = arith.addf %116, %117 : vector<4x32xf32>
    %119 = math.tanh %118 : vector<4x32xf32>
    %120 = vector.extract_strided_slice %48 {offsets = [1, 0, 0], sizes = [1, 4, 32], strides = [1, 1, 1]} : vector<8x4x32xf32> to vector<1x4x32xf32>
    %121 = vector.shape_cast %120 : vector<1x4x32xf32> to vector<4x32xf32>
    %cst_36 = arith.constant dense<0.000000e+00> : vector<4x32xf32>
    %122 = tpu.matmul %96, %57, %cst_36 {dimension_numbers = #tpu.dot_dimension_numbers<[1], [0], [0], [1], [0, 0, 1, 1], [], []>} : vector<4x32xf32>, vector<32x32xf32>, vector<4x32xf32> -> vector<4x32xf32>
    %123 = arith.addf %121, %122 : vector<4x32xf32>
    %124 = arith.negf %123 : vector<4x32xf32>
    %125 = math.exp %124 : vector<4x32xf32>
    %cst_37 = arith.constant 1.000000e+00 : f32
    %126 = vector.broadcast %cst_37 : f32 to vector<4x32xf32>
    %127 = arith.addf %126, %125 : vector<4x32xf32>
    %128 = arith.divf %126, %127 : vector<4x32xf32>
    %129 = arith.mulf %114, %94 : vector<4x32xf32>
    %130 = arith.mulf %105, %119 : vector<4x32xf32>
    %131 = arith.addf %129, %130 : vector<4x32xf32>
    %132 = math.tanh %131 : vector<4x32xf32>
    %133 = arith.mulf %128, %132 : vector<4x32xf32>
    %134 = vector.extract_strided_slice %24 {offsets = [2, 0, 0], sizes = [1, 4, 32], strides = [1, 1, 1]} : vector<8x4x32xf32> to vector<1x4x32xf32>
    %135 = vector.shape_cast %134 : vector<1x4x32xf32> to vector<4x32xf32>
    %cst_38 = arith.constant dense<0.000000e+00> : vector<4x32xf32>
    %136 = tpu.matmul %133, %51, %cst_38 {dimension_numbers = #tpu.dot_dimension_numbers<[1], [0], [0], [1], [0, 0, 1, 1], [], []>} : vector<4x32xf32>, vector<32x32xf32>, vector<4x32xf32> -> vector<4x32xf32>
    %137 = arith.addf %135, %136 : vector<4x32xf32>
    %138 = arith.negf %137 : vector<4x32xf32>
    %139 = math.exp %138 : vector<4x32xf32>
    %cst_39 = arith.constant 1.000000e+00 : f32
    %140 = vector.broadcast %cst_39 : f32 to vector<4x32xf32>
    %141 = arith.addf %140, %139 : vector<4x32xf32>
    %142 = arith.divf %140, %141 : vector<4x32xf32>
    %143 = vector.extract_strided_slice %32 {offsets = [2, 0, 0], sizes = [1, 4, 32], strides = [1, 1, 1]} : vector<8x4x32xf32> to vector<1x4x32xf32>
    %144 = vector.shape_cast %143 : vector<1x4x32xf32> to vector<4x32xf32>
    %cst_40 = arith.constant dense<0.000000e+00> : vector<4x32xf32>
    %145 = tpu.matmul %133, %53, %cst_40 {dimension_numbers = #tpu.dot_dimension_numbers<[1], [0], [0], [1], [0, 0, 1, 1], [], []>} : vector<4x32xf32>, vector<32x32xf32>, vector<4x32xf32> -> vector<4x32xf32>
    %146 = arith.addf %144, %145 : vector<4x32xf32>
    %147 = arith.negf %146 : vector<4x32xf32>
    %148 = math.exp %147 : vector<4x32xf32>
    %cst_41 = arith.constant 1.000000e+00 : f32
    %149 = vector.broadcast %cst_41 : f32 to vector<4x32xf32>
    %150 = arith.addf %149, %148 : vector<4x32xf32>
    %151 = arith.divf %149, %150 : vector<4x32xf32>
    %152 = vector.extract_strided_slice %40 {offsets = [2, 0, 0], sizes = [1, 4, 32], strides = [1, 1, 1]} : vector<8x4x32xf32> to vector<1x4x32xf32>
    %153 = vector.shape_cast %152 : vector<1x4x32xf32> to vector<4x32xf32>
    %cst_42 = arith.constant dense<0.000000e+00> : vector<4x32xf32>
    %154 = tpu.matmul %133, %55, %cst_42 {dimension_numbers = #tpu.dot_dimension_numbers<[1], [0], [0], [1], [0, 0, 1, 1], [], []>} : vector<4x32xf32>, vector<32x32xf32>, vector<4x32xf32> -> vector<4x32xf32>
    %155 = arith.addf %153, %154 : vector<4x32xf32>
    %156 = math.tanh %155 : vector<4x32xf32>
    %157 = vector.extract_strided_slice %48 {offsets = [2, 0, 0], sizes = [1, 4, 32], strides = [1, 1, 1]} : vector<8x4x32xf32> to vector<1x4x32xf32>
    %158 = vector.shape_cast %157 : vector<1x4x32xf32> to vector<4x32xf32>
    %cst_43 = arith.constant dense<0.000000e+00> : vector<4x32xf32>
    %159 = tpu.matmul %133, %57, %cst_43 {dimension_numbers = #tpu.dot_dimension_numbers<[1], [0], [0], [1], [0, 0, 1, 1], [], []>} : vector<4x32xf32>, vector<32x32xf32>, vector<4x32xf32> -> vector<4x32xf32>
    %160 = arith.addf %158, %159 : vector<4x32xf32>
    %161 = arith.negf %160 : vector<4x32xf32>
    %162 = math.exp %161 : vector<4x32xf32>
    %cst_44 = arith.constant 1.000000e+00 : f32
    %163 = vector.broadcast %cst_44 : f32 to vector<4x32xf32>
    %164 = arith.addf %163, %162 : vector<4x32xf32>
    %165 = arith.divf %163, %164 : vector<4x32xf32>
    %166 = arith.mulf %151, %131 : vector<4x32xf32>
    %167 = arith.mulf %142, %156 : vector<4x32xf32>
    %168 = arith.addf %166, %167 : vector<4x32xf32>
    %169 = math.tanh %168 : vector<4x32xf32>
    %170 = arith.mulf %165, %169 : vector<4x32xf32>
    %171 = vector.extract_strided_slice %24 {offsets = [3, 0, 0], sizes = [1, 4, 32], strides = [1, 1, 1]} : vector<8x4x32xf32> to vector<1x4x32xf32>
    %172 = vector.shape_cast %171 : vector<1x4x32xf32> to vector<4x32xf32>
    %cst_45 = arith.constant dense<0.000000e+00> : vector<4x32xf32>
    %173 = tpu.matmul %170, %51, %cst_45 {dimension_numbers = #tpu.dot_dimension_numbers<[1], [0], [0], [1], [0, 0, 1, 1], [], []>} : vector<4x32xf32>, vector<32x32xf32>, vector<4x32xf32> -> vector<4x32xf32>
    %174 = arith.addf %172, %173 : vector<4x32xf32>
    %175 = arith.negf %174 : vector<4x32xf32>
    %176 = math.exp %175 : vector<4x32xf32>
    %cst_46 = arith.constant 1.000000e+00 : f32
    %177 = vector.broadcast %cst_46 : f32 to vector<4x32xf32>
    %178 = arith.addf %177, %176 : vector<4x32xf32>
    %179 = arith.divf %177, %178 : vector<4x32xf32>
    %180 = vector.extract_strided_slice %32 {offsets = [3, 0, 0], sizes = [1, 4, 32], strides = [1, 1, 1]} : vector<8x4x32xf32> to vector<1x4x32xf32>
    %181 = vector.shape_cast %180 : vector<1x4x32xf32> to vector<4x32xf32>
    %cst_47 = arith.constant dense<0.000000e+00> : vector<4x32xf32>
    %182 = tpu.matmul %170, %53, %cst_47 {dimension_numbers = #tpu.dot_dimension_numbers<[1], [0], [0], [1], [0, 0, 1, 1], [], []>} : vector<4x32xf32>, vector<32x32xf32>, vector<4x32xf32> -> vector<4x32xf32>
    %183 = arith.addf %181, %182 : vector<4x32xf32>
    %184 = arith.negf %183 : vector<4x32xf32>
    %185 = math.exp %184 : vector<4x32xf32>
    %cst_48 = arith.constant 1.000000e+00 : f32
    %186 = vector.broadcast %cst_48 : f32 to vector<4x32xf32>
    %187 = arith.addf %186, %185 : vector<4x32xf32>
    %188 = arith.divf %186, %187 : vector<4x32xf32>
    %189 = vector.extract_strided_slice %40 {offsets = [3, 0, 0], sizes = [1, 4, 32], strides = [1, 1, 1]} : vector<8x4x32xf32> to vector<1x4x32xf32>
    %190 = vector.shape_cast %189 : vector<1x4x32xf32> to vector<4x32xf32>
    %cst_49 = arith.constant dense<0.000000e+00> : vector<4x32xf32>
    %191 = tpu.matmul %170, %55, %cst_49 {dimension_numbers = #tpu.dot_dimension_numbers<[1], [0], [0], [1], [0, 0, 1, 1], [], []>} : vector<4x32xf32>, vector<32x32xf32>, vector<4x32xf32> -> vector<4x32xf32>
    %192 = arith.addf %190, %191 : vector<4x32xf32>
    %193 = math.tanh %192 : vector<4x32xf32>
    %194 = vector.extract_strided_slice %48 {offsets = [3, 0, 0], sizes = [1, 4, 32], strides = [1, 1, 1]} : vector<8x4x32xf32> to vector<1x4x32xf32>
    %195 = vector.shape_cast %194 : vector<1x4x32xf32> to vector<4x32xf32>
    %cst_50 = arith.constant dense<0.000000e+00> : vector<4x32xf32>
    %196 = tpu.matmul %170, %57, %cst_50 {dimension_numbers = #tpu.dot_dimension_numbers<[1], [0], [0], [1], [0, 0, 1, 1], [], []>} : vector<4x32xf32>, vector<32x32xf32>, vector<4x32xf32> -> vector<4x32xf32>
    %197 = arith.addf %195, %196 : vector<4x32xf32>
    %198 = arith.negf %197 : vector<4x32xf32>
    %199 = math.exp %198 : vector<4x32xf32>
    %cst_51 = arith.constant 1.000000e+00 : f32
    %200 = vector.broadcast %cst_51 : f32 to vector<4x32xf32>
    %201 = arith.addf %200, %199 : vector<4x32xf32>
    %202 = arith.divf %200, %201 : vector<4x32xf32>
    %203 = arith.mulf %188, %168 : vector<4x32xf32>
    %204 = arith.mulf %179, %193 : vector<4x32xf32>
    %205 = arith.addf %203, %204 : vector<4x32xf32>
    %206 = math.tanh %205 : vector<4x32xf32>
    %207 = arith.mulf %202, %206 : vector<4x32xf32>
    %208 = vector.extract_strided_slice %24 {offsets = [4, 0, 0], sizes = [1, 4, 32], strides = [1, 1, 1]} : vector<8x4x32xf32> to vector<1x4x32xf32>
    %209 = vector.shape_cast %208 : vector<1x4x32xf32> to vector<4x32xf32>
    %cst_52 = arith.constant dense<0.000000e+00> : vector<4x32xf32>
    %210 = tpu.matmul %207, %51, %cst_52 {dimension_numbers = #tpu.dot_dimension_numbers<[1], [0], [0], [1], [0, 0, 1, 1], [], []>} : vector<4x32xf32>, vector<32x32xf32>, vector<4x32xf32> -> vector<4x32xf32>
    %211 = arith.addf %209, %210 : vector<4x32xf32>
    %212 = arith.negf %211 : vector<4x32xf32>
    %213 = math.exp %212 : vector<4x32xf32>
    %cst_53 = arith.constant 1.000000e+00 : f32
    %214 = vector.broadcast %cst_53 : f32 to vector<4x32xf32>
    %215 = arith.addf %214, %213 : vector<4x32xf32>
    %216 = arith.divf %214, %215 : vector<4x32xf32>
    %217 = vector.extract_strided_slice %32 {offsets = [4, 0, 0], sizes = [1, 4, 32], strides = [1, 1, 1]} : vector<8x4x32xf32> to vector<1x4x32xf32>
    %218 = vector.shape_cast %217 : vector<1x4x32xf32> to vector<4x32xf32>
    %cst_54 = arith.constant dense<0.000000e+00> : vector<4x32xf32>
    %219 = tpu.matmul %207, %53, %cst_54 {dimension_numbers = #tpu.dot_dimension_numbers<[1], [0], [0], [1], [0, 0, 1, 1], [], []>} : vector<4x32xf32>, vector<32x32xf32>, vector<4x32xf32> -> vector<4x32xf32>
    %220 = arith.addf %218, %219 : vector<4x32xf32>
    %221 = arith.negf %220 : vector<4x32xf32>
    %222 = math.exp %221 : vector<4x32xf32>
    %cst_55 = arith.constant 1.000000e+00 : f32
    %223 = vector.broadcast %cst_55 : f32 to vector<4x32xf32>
    %224 = arith.addf %223, %222 : vector<4x32xf32>
    %225 = arith.divf %223, %224 : vector<4x32xf32>
    %226 = vector.extract_strided_slice %40 {offsets = [4, 0, 0], sizes = [1, 4, 32], strides = [1, 1, 1]} : vector<8x4x32xf32> to vector<1x4x32xf32>
    %227 = vector.shape_cast %226 : vector<1x4x32xf32> to vector<4x32xf32>
    %cst_56 = arith.constant dense<0.000000e+00> : vector<4x32xf32>
    %228 = tpu.matmul %207, %55, %cst_56 {dimension_numbers = #tpu.dot_dimension_numbers<[1], [0], [0], [1], [0, 0, 1, 1], [], []>} : vector<4x32xf32>, vector<32x32xf32>, vector<4x32xf32> -> vector<4x32xf32>
    %229 = arith.addf %227, %228 : vector<4x32xf32>
    %230 = math.tanh %229 : vector<4x32xf32>
    %231 = vector.extract_strided_slice %48 {offsets = [4, 0, 0], sizes = [1, 4, 32], strides = [1, 1, 1]} : vector<8x4x32xf32> to vector<1x4x32xf32>
    %232 = vector.shape_cast %231 : vector<1x4x32xf32> to vector<4x32xf32>
    %cst_57 = arith.constant dense<0.000000e+00> : vector<4x32xf32>
    %233 = tpu.matmul %207, %57, %cst_57 {dimension_numbers = #tpu.dot_dimension_numbers<[1], [0], [0], [1], [0, 0, 1, 1], [], []>} : vector<4x32xf32>, vector<32x32xf32>, vector<4x32xf32> -> vector<4x32xf32>
    %234 = arith.addf %232, %233 : vector<4x32xf32>
    %235 = arith.negf %234 : vector<4x32xf32>
    %236 = math.exp %235 : vector<4x32xf32>
    %cst_58 = arith.constant 1.000000e+00 : f32
    %237 = vector.broadcast %cst_58 : f32 to vector<4x32xf32>
    %238 = arith.addf %237, %236 : vector<4x32xf32>
    %239 = arith.divf %237, %238 : vector<4x32xf32>
    %240 = arith.mulf %225, %205 : vector<4x32xf32>
    %241 = arith.mulf %216, %230 : vector<4x32xf32>
    %242 = arith.addf %240, %241 : vector<4x32xf32>
    %243 = math.tanh %242 : vector<4x32xf32>
    %244 = arith.mulf %239, %243 : vector<4x32xf32>
    %245 = vector.extract_strided_slice %24 {offsets = [5, 0, 0], sizes = [1, 4, 32], strides = [1, 1, 1]} : vector<8x4x32xf32> to vector<1x4x32xf32>
    %246 = vector.shape_cast %245 : vector<1x4x32xf32> to vector<4x32xf32>
    %cst_59 = arith.constant dense<0.000000e+00> : vector<4x32xf32>
    %247 = tpu.matmul %244, %51, %cst_59 {dimension_numbers = #tpu.dot_dimension_numbers<[1], [0], [0], [1], [0, 0, 1, 1], [], []>} : vector<4x32xf32>, vector<32x32xf32>, vector<4x32xf32> -> vector<4x32xf32>
    %248 = arith.addf %246, %247 : vector<4x32xf32>
    %249 = arith.negf %248 : vector<4x32xf32>
    %250 = math.exp %249 : vector<4x32xf32>
    %cst_60 = arith.constant 1.000000e+00 : f32
    %251 = vector.broadcast %cst_60 : f32 to vector<4x32xf32>
    %252 = arith.addf %251, %250 : vector<4x32xf32>
    %253 = arith.divf %251, %252 : vector<4x32xf32>
    %254 = vector.extract_strided_slice %32 {offsets = [5, 0, 0], sizes = [1, 4, 32], strides = [1, 1, 1]} : vector<8x4x32xf32> to vector<1x4x32xf32>
    %255 = vector.shape_cast %254 : vector<1x4x32xf32> to vector<4x32xf32>
    %cst_61 = arith.constant dense<0.000000e+00> : vector<4x32xf32>
    %256 = tpu.matmul %244, %53, %cst_61 {dimension_numbers = #tpu.dot_dimension_numbers<[1], [0], [0], [1], [0, 0, 1, 1], [], []>} : vector<4x32xf32>, vector<32x32xf32>, vector<4x32xf32> -> vector<4x32xf32>
    %257 = arith.addf %255, %256 : vector<4x32xf32>
    %258 = arith.negf %257 : vector<4x32xf32>
    %259 = math.exp %258 : vector<4x32xf32>
    %cst_62 = arith.constant 1.000000e+00 : f32
    %260 = vector.broadcast %cst_62 : f32 to vector<4x32xf32>
    %261 = arith.addf %260, %259 : vector<4x32xf32>
    %262 = arith.divf %260, %261 : vector<4x32xf32>
    %263 = vector.extract_strided_slice %40 {offsets = [5, 0, 0], sizes = [1, 4, 32], strides = [1, 1, 1]} : vector<8x4x32xf32> to vector<1x4x32xf32>
    %264 = vector.shape_cast %263 : vector<1x4x32xf32> to vector<4x32xf32>
    %cst_63 = arith.constant dense<0.000000e+00> : vector<4x32xf32>
    %265 = tpu.matmul %244, %55, %cst_63 {dimension_numbers = #tpu.dot_dimension_numbers<[1], [0], [0], [1], [0, 0, 1, 1], [], []>} : vector<4x32xf32>, vector<32x32xf32>, vector<4x32xf32> -> vector<4x32xf32>
    %266 = arith.addf %264, %265 : vector<4x32xf32>
    %267 = math.tanh %266 : vector<4x32xf32>
    %268 = vector.extract_strided_slice %48 {offsets = [5, 0, 0], sizes = [1, 4, 32], strides = [1, 1, 1]} : vector<8x4x32xf32> to vector<1x4x32xf32>
    %269 = vector.shape_cast %268 : vector<1x4x32xf32> to vector<4x32xf32>
    %cst_64 = arith.constant dense<0.000000e+00> : vector<4x32xf32>
    %270 = tpu.matmul %244, %57, %cst_64 {dimension_numbers = #tpu.dot_dimension_numbers<[1], [0], [0], [1], [0, 0, 1, 1], [], []>} : vector<4x32xf32>, vector<32x32xf32>, vector<4x32xf32> -> vector<4x32xf32>
    %271 = arith.addf %269, %270 : vector<4x32xf32>
    %272 = arith.negf %271 : vector<4x32xf32>
    %273 = math.exp %272 : vector<4x32xf32>
    %cst_65 = arith.constant 1.000000e+00 : f32
    %274 = vector.broadcast %cst_65 : f32 to vector<4x32xf32>
    %275 = arith.addf %274, %273 : vector<4x32xf32>
    %276 = arith.divf %274, %275 : vector<4x32xf32>
    %277 = arith.mulf %262, %242 : vector<4x32xf32>
    %278 = arith.mulf %253, %267 : vector<4x32xf32>
    %279 = arith.addf %277, %278 : vector<4x32xf32>
    %280 = math.tanh %279 : vector<4x32xf32>
    %281 = arith.mulf %276, %280 : vector<4x32xf32>
    %282 = vector.extract_strided_slice %24 {offsets = [6, 0, 0], sizes = [1, 4, 32], strides = [1, 1, 1]} : vector<8x4x32xf32> to vector<1x4x32xf32>
    %283 = vector.shape_cast %282 : vector<1x4x32xf32> to vector<4x32xf32>
    %cst_66 = arith.constant dense<0.000000e+00> : vector<4x32xf32>
    %284 = tpu.matmul %281, %51, %cst_66 {dimension_numbers = #tpu.dot_dimension_numbers<[1], [0], [0], [1], [0, 0, 1, 1], [], []>} : vector<4x32xf32>, vector<32x32xf32>, vector<4x32xf32> -> vector<4x32xf32>
    %285 = arith.addf %283, %284 : vector<4x32xf32>
    %286 = arith.negf %285 : vector<4x32xf32>
    %287 = math.exp %286 : vector<4x32xf32>
    %cst_67 = arith.constant 1.000000e+00 : f32
    %288 = vector.broadcast %cst_67 : f32 to vector<4x32xf32>
    %289 = arith.addf %288, %287 : vector<4x32xf32>
    %290 = arith.divf %288, %289 : vector<4x32xf32>
    %291 = vector.extract_strided_slice %32 {offsets = [6, 0, 0], sizes = [1, 4, 32], strides = [1, 1, 1]} : vector<8x4x32xf32> to vector<1x4x32xf32>
    %292 = vector.shape_cast %291 : vector<1x4x32xf32> to vector<4x32xf32>
    %cst_68 = arith.constant dense<0.000000e+00> : vector<4x32xf32>
    %293 = tpu.matmul %281, %53, %cst_68 {dimension_numbers = #tpu.dot_dimension_numbers<[1], [0], [0], [1], [0, 0, 1, 1], [], []>} : vector<4x32xf32>, vector<32x32xf32>, vector<4x32xf32> -> vector<4x32xf32>
    %294 = arith.addf %292, %293 : vector<4x32xf32>
    %295 = arith.negf %294 : vector<4x32xf32>
    %296 = math.exp %295 : vector<4x32xf32>
    %cst_69 = arith.constant 1.000000e+00 : f32
    %297 = vector.broadcast %cst_69 : f32 to vector<4x32xf32>
    %298 = arith.addf %297, %296 : vector<4x32xf32>
    %299 = arith.divf %297, %298 : vector<4x32xf32>
    %300 = vector.extract_strided_slice %40 {offsets = [6, 0, 0], sizes = [1, 4, 32], strides = [1, 1, 1]} : vector<8x4x32xf32> to vector<1x4x32xf32>
    %301 = vector.shape_cast %300 : vector<1x4x32xf32> to vector<4x32xf32>
    %cst_70 = arith.constant dense<0.000000e+00> : vector<4x32xf32>
    %302 = tpu.matmul %281, %55, %cst_70 {dimension_numbers = #tpu.dot_dimension_numbers<[1], [0], [0], [1], [0, 0, 1, 1], [], []>} : vector<4x32xf32>, vector<32x32xf32>, vector<4x32xf32> -> vector<4x32xf32>
    %303 = arith.addf %301, %302 : vector<4x32xf32>
    %304 = math.tanh %303 : vector<4x32xf32>
    %305 = vector.extract_strided_slice %48 {offsets = [6, 0, 0], sizes = [1, 4, 32], strides = [1, 1, 1]} : vector<8x4x32xf32> to vector<1x4x32xf32>
    %306 = vector.shape_cast %305 : vector<1x4x32xf32> to vector<4x32xf32>
    %cst_71 = arith.constant dense<0.000000e+00> : vector<4x32xf32>
    %307 = tpu.matmul %281, %57, %cst_71 {dimension_numbers = #tpu.dot_dimension_numbers<[1], [0], [0], [1], [0, 0, 1, 1], [], []>} : vector<4x32xf32>, vector<32x32xf32>, vector<4x32xf32> -> vector<4x32xf32>
    %308 = arith.addf %306, %307 : vector<4x32xf32>
    %309 = arith.negf %308 : vector<4x32xf32>
    %310 = math.exp %309 : vector<4x32xf32>
    %cst_72 = arith.constant 1.000000e+00 : f32
    %311 = vector.broadcast %cst_72 : f32 to vector<4x32xf32>
    %312 = arith.addf %311, %310 : vector<4x32xf32>
    %313 = arith.divf %311, %312 : vector<4x32xf32>
    %314 = arith.mulf %299, %279 : vector<4x32xf32>
    %315 = arith.mulf %290, %304 : vector<4x32xf32>
    %316 = arith.addf %314, %315 : vector<4x32xf32>
    %317 = math.tanh %316 : vector<4x32xf32>
    %318 = arith.mulf %313, %317 : vector<4x32xf32>
    %319 = vector.extract_strided_slice %24 {offsets = [7, 0, 0], sizes = [1, 4, 32], strides = [1, 1, 1]} : vector<8x4x32xf32> to vector<1x4x32xf32>
    %320 = vector.shape_cast %319 : vector<1x4x32xf32> to vector<4x32xf32>
    %cst_73 = arith.constant dense<0.000000e+00> : vector<4x32xf32>
    %321 = tpu.matmul %318, %51, %cst_73 {dimension_numbers = #tpu.dot_dimension_numbers<[1], [0], [0], [1], [0, 0, 1, 1], [], []>} : vector<4x32xf32>, vector<32x32xf32>, vector<4x32xf32> -> vector<4x32xf32>
    %322 = arith.addf %320, %321 : vector<4x32xf32>
    %323 = arith.negf %322 : vector<4x32xf32>
    %324 = math.exp %323 : vector<4x32xf32>
    %cst_74 = arith.constant 1.000000e+00 : f32
    %325 = vector.broadcast %cst_74 : f32 to vector<4x32xf32>
    %326 = arith.addf %325, %324 : vector<4x32xf32>
    %327 = arith.divf %325, %326 : vector<4x32xf32>
    %328 = vector.extract_strided_slice %32 {offsets = [7, 0, 0], sizes = [1, 4, 32], strides = [1, 1, 1]} : vector<8x4x32xf32> to vector<1x4x32xf32>
    %329 = vector.shape_cast %328 : vector<1x4x32xf32> to vector<4x32xf32>
    %cst_75 = arith.constant dense<0.000000e+00> : vector<4x32xf32>
    %330 = tpu.matmul %318, %53, %cst_75 {dimension_numbers = #tpu.dot_dimension_numbers<[1], [0], [0], [1], [0, 0, 1, 1], [], []>} : vector<4x32xf32>, vector<32x32xf32>, vector<4x32xf32> -> vector<4x32xf32>
    %331 = arith.addf %329, %330 : vector<4x32xf32>
    %332 = arith.negf %331 : vector<4x32xf32>
    %333 = math.exp %332 : vector<4x32xf32>
    %cst_76 = arith.constant 1.000000e+00 : f32
    %334 = vector.broadcast %cst_76 : f32 to vector<4x32xf32>
    %335 = arith.addf %334, %333 : vector<4x32xf32>
    %336 = arith.divf %334, %335 : vector<4x32xf32>
    %337 = vector.extract_strided_slice %40 {offsets = [7, 0, 0], sizes = [1, 4, 32], strides = [1, 1, 1]} : vector<8x4x32xf32> to vector<1x4x32xf32>
    %338 = vector.shape_cast %337 : vector<1x4x32xf32> to vector<4x32xf32>
    %cst_77 = arith.constant dense<0.000000e+00> : vector<4x32xf32>
    %339 = tpu.matmul %318, %55, %cst_77 {dimension_numbers = #tpu.dot_dimension_numbers<[1], [0], [0], [1], [0, 0, 1, 1], [], []>} : vector<4x32xf32>, vector<32x32xf32>, vector<4x32xf32> -> vector<4x32xf32>
    %340 = arith.addf %338, %339 : vector<4x32xf32>
    %341 = math.tanh %340 : vector<4x32xf32>
    %342 = vector.extract_strided_slice %48 {offsets = [7, 0, 0], sizes = [1, 4, 32], strides = [1, 1, 1]} : vector<8x4x32xf32> to vector<1x4x32xf32>
    %343 = vector.shape_cast %342 : vector<1x4x32xf32> to vector<4x32xf32>
    %cst_78 = arith.constant dense<0.000000e+00> : vector<4x32xf32>
    %344 = tpu.matmul %318, %57, %cst_78 {dimension_numbers = #tpu.dot_dimension_numbers<[1], [0], [0], [1], [0, 0, 1, 1], [], []>} : vector<4x32xf32>, vector<32x32xf32>, vector<4x32xf32> -> vector<4x32xf32>
    %345 = arith.addf %343, %344 : vector<4x32xf32>
    %346 = arith.negf %345 : vector<4x32xf32>
    %347 = math.exp %346 : vector<4x32xf32>
    %cst_79 = arith.constant 1.000000e+00 : f32
    %348 = vector.broadcast %cst_79 : f32 to vector<4x32xf32>
    %349 = arith.addf %348, %347 : vector<4x32xf32>
    %350 = arith.divf %348, %349 : vector<4x32xf32>
    %351 = arith.mulf %336, %316 : vector<4x32xf32>
    %352 = arith.mulf %327, %341 : vector<4x32xf32>
    %353 = arith.addf %351, %352 : vector<4x32xf32>
    %354 = math.tanh %353 : vector<4x32xf32>
    %355 = arith.mulf %350, %354 : vector<4x32xf32>
    %356 = vector.shape_cast %96 : vector<4x32xf32> to vector<1x4x32xf32>
    %357 = vector.shape_cast %133 : vector<4x32xf32> to vector<1x4x32xf32>
    %358 = vector.shape_cast %170 : vector<4x32xf32> to vector<1x4x32xf32>
    %359 = vector.shape_cast %207 : vector<4x32xf32> to vector<1x4x32xf32>
    %360 = vector.shape_cast %244 : vector<4x32xf32> to vector<1x4x32xf32>
    %361 = vector.shape_cast %281 : vector<4x32xf32> to vector<1x4x32xf32>
    %362 = vector.shape_cast %318 : vector<4x32xf32> to vector<1x4x32xf32>
    %363 = vector.shape_cast %355 : vector<4x32xf32> to vector<1x4x32xf32>
    %364 = tpu.concatenate %356, %357, %358, %359, %360, %361, %362, %363 in 0 : vector<1x4x32xf32>, vector<1x4x32xf32>, vector<1x4x32xf32>, vector<1x4x32xf32>, vector<1x4x32xf32>, vector<1x4x32xf32>, vector<1x4x32xf32>, vector<1x4x32xf32> -> vector<8x4x32xf32>
    %365 = vector.shape_cast %364 : vector<8x4x32xf32> to vector<32x32xf32>
    %c0_80 = arith.constant 0 : index
    %c0_81 = arith.constant 0 : index
    %366 = vector.load %arg7[%c0_80, %c0_81] : memref<32x16xf32, #tpu.memory_space<vmem>>, vector<32x16xf32>
    %cst_82 = arith.constant dense<0.000000e+00> : vector<32x16xf32>
    %367 = tpu.matmul %365, %366, %cst_82 {dimension_numbers = #tpu.dot_dimension_numbers<[1], [0], [0], [1], [0, 0, 1, 1], [], []>} : vector<32x32xf32>, vector<32x16xf32>, vector<32x16xf32> -> vector<32x16xf32>
    %368 = math.tanh %367 : vector<32x16xf32>
    %c0_83 = arith.constant 0 : index
    %c0_84 = arith.constant 0 : index
    %369 = vector.load %arg8[%c0_83, %c0_84] : memref<1x16xf32, #tpu.memory_space<vmem>>, vector<1x16xf32>
    %370 = vector.broadcast %369 : vector<1x16xf32> to vector<32x16xf32>
    %371 = arith.mulf %368, %370 : vector<32x16xf32>
    %cst_85 = arith.constant dense<0.000000e+00> : vector<32xf32>
    %372 = vector.multi_reduction <add>, %371, %cst_85 [1] : vector<32x16xf32> to vector<32xf32>
    %373 = vector.shape_cast %372 : vector<32xf32> to vector<32x1xf32>
    %374 = vector.shape_cast %373 : vector<32x1xf32> to vector<8x4x1xf32>
    %cst_86 = arith.constant dense<0xFF800000> : vector<4x1xf32>
    %375 = vector.multi_reduction <maximumf>, %374, %cst_86 [0] : vector<8x4x1xf32> to vector<4x1xf32>
    %376 = vector.shape_cast %375 : vector<4x1xf32> to vector<1x4x1xf32>
    %377 = vector.broadcast %376 : vector<1x4x1xf32> to vector<8x4x1xf32>
    %378 = arith.subf %374, %377 : vector<8x4x1xf32>
    %379 = math.exp %378 : vector<8x4x1xf32>
    %cst_87 = arith.constant dense<0.000000e+00> : vector<4x1xf32>
    %380 = vector.multi_reduction <add>, %379, %cst_87 [0] : vector<8x4x1xf32> to vector<4x1xf32>
    %381 = vector.shape_cast %380 : vector<4x1xf32> to vector<1x4x1xf32>
    %382 = tpu.reciprocal %381 {approx = true} : vector<1x4x1xf32> -> vector<1x4x1xf32>
    %383 = vector.broadcast %382 : vector<1x4x1xf32> to vector<8x4x1xf32>
    %384 = arith.mulf %379, %383 : vector<8x4x1xf32>
    %385 = vector.broadcast %384 : vector<8x4x1xf32> to vector<8x4x32xf32>
    %386 = arith.mulf %364, %385 : vector<8x4x32xf32>
    %cst_88 = arith.constant dense<0.000000e+00> : vector<4x32xf32>
    %387 = vector.multi_reduction <add>, %386, %cst_88 [0] : vector<8x4x32xf32> to vector<4x32xf32>
    %388 = vector.extract_strided_slice %387 {offsets = [0, 0], sizes = [2, 32], strides = [1, 1]} : vector<4x32xf32> to vector<2x32xf32>
    %389 = vector.extract_strided_slice %387 {offsets = [2, 0], sizes = [2, 32], strides = [1, 1]} : vector<4x32xf32> to vector<2x32xf32>
    %390 = arith.subf %388, %389 : vector<2x32xf32>
    %391 = math.absf %390 : vector<2x32xf32>
    %392 = arith.mulf %388, %389 : vector<2x32xf32>
    %393 = tpu.concatenate %388, %389, %391, %392 in 1 : vector<2x32xf32>, vector<2x32xf32>, vector<2x32xf32>, vector<2x32xf32> -> vector<2x128xf32>
    %c0_89 = arith.constant 0 : index
    %c0_90 = arith.constant 0 : index
    %394 = vector.load %arg9[%c0_89, %c0_90] : memref<128x32xf32, #tpu.memory_space<vmem>>, vector<128x32xf32>
    %cst_91 = arith.constant dense<0.000000e+00> : vector<2x32xf32>
    %395 = tpu.matmul %393, %394, %cst_91 {dimension_numbers = #tpu.dot_dimension_numbers<[1], [0], [0], [1], [0, 0, 1, 1], [], []>} : vector<2x128xf32>, vector<128x32xf32>, vector<2x32xf32> -> vector<2x32xf32>
    %c0_92 = arith.constant 0 : index
    %c0_93 = arith.constant 0 : index
    %396 = vector.load %arg10[%c0_92, %c0_93] : memref<1x32xf32, #tpu.memory_space<vmem>>, vector<1x32xf32>
    %397 = vector.broadcast %396 : vector<1x32xf32> to vector<2x32xf32>
    %398 = arith.addf %395, %397 : vector<2x32xf32>
    %c0_94 = arith.constant 0 : index
    %c0_95 = arith.constant 0 : index
    %c0_96 = arith.constant 0 : index
    %399 = vector.load %arg11[%c0_94, %c0_95, %c0_96] : memref<2x32x32xf32, #tpu.memory_space<vmem>>, vector<2x32x32xf32>
    %c0_97 = arith.constant 0 : index
    %c0_98 = arith.constant 0 : index
    %c0_99 = arith.constant 0 : index
    %400 = vector.load %arg12[%c0_97, %c0_98, %c0_99] : memref<2x1x32xf32, #tpu.memory_space<vmem>>, vector<2x1x32xf32>
    %401 = vector.extract_strided_slice %399 {offsets = [0, 0, 0], sizes = [1, 32, 32], strides = [1, 1, 1]} : vector<2x32x32xf32> to vector<1x32x32xf32>
    %402 = vector.shape_cast %401 : vector<1x32x32xf32> to vector<32x32xf32>
    %cst_100 = arith.constant dense<0.000000e+00> : vector<2x32xf32>
    %403 = tpu.matmul %398, %402, %cst_100 {dimension_numbers = #tpu.dot_dimension_numbers<[1], [0], [0], [1], [0, 0, 1, 1], [], []>} : vector<2x32xf32>, vector<32x32xf32>, vector<2x32xf32> -> vector<2x32xf32>
    %404 = vector.extract_strided_slice %400 {offsets = [0, 0, 0], sizes = [1, 1, 32], strides = [1, 1, 1]} : vector<2x1x32xf32> to vector<1x1x32xf32>
    %405 = vector.shape_cast %404 : vector<1x1x32xf32> to vector<1x32xf32>
    %406 = vector.broadcast %405 : vector<1x32xf32> to vector<2x32xf32>
    %407 = arith.addf %403, %406 : vector<2x32xf32>
    %cst_101 = arith.constant 0.000000e+00 : f32
    %408 = vector.broadcast %cst_101 : f32 to vector<2x32xf32>
    %409 = arith.maximumf %407, %408 : vector<2x32xf32>
    %410 = vector.extract_strided_slice %399 {offsets = [1, 0, 0], sizes = [1, 32, 32], strides = [1, 1, 1]} : vector<2x32x32xf32> to vector<1x32x32xf32>
    %411 = vector.shape_cast %410 : vector<1x32x32xf32> to vector<32x32xf32>
    %cst_102 = arith.constant dense<0.000000e+00> : vector<2x32xf32>
    %412 = tpu.matmul %409, %411, %cst_102 {dimension_numbers = #tpu.dot_dimension_numbers<[1], [0], [0], [1], [0, 0, 1, 1], [], []>} : vector<2x32xf32>, vector<32x32xf32>, vector<2x32xf32> -> vector<2x32xf32>
    %413 = vector.extract_strided_slice %400 {offsets = [1, 0, 0], sizes = [1, 1, 32], strides = [1, 1, 1]} : vector<2x1x32xf32> to vector<1x1x32xf32>
    %414 = vector.shape_cast %413 : vector<1x1x32xf32> to vector<1x32xf32>
    %415 = vector.broadcast %414 : vector<1x32xf32> to vector<2x32xf32>
    %416 = arith.addf %412, %415 : vector<2x32xf32>
    %cst_103 = arith.constant 0.000000e+00 : f32
    %417 = vector.broadcast %cst_103 : f32 to vector<2x32xf32>
    %418 = arith.maximumf %416, %417 : vector<2x32xf32>
    %c0_104 = arith.constant 0 : index
    %c0_105 = arith.constant 0 : index
    %419 = vector.load %arg13[%c0_104, %c0_105] : memref<32x128xf32, #tpu.memory_space<vmem>>, vector<32x128xf32>
    %cst_106 = arith.constant dense<0.000000e+00> : vector<2x128xf32>
    %420 = tpu.matmul %418, %419, %cst_106 {dimension_numbers = #tpu.dot_dimension_numbers<[1], [0], [0], [1], [0, 0, 1, 1], [], []>} : vector<2x32xf32>, vector<32x128xf32>, vector<2x128xf32> -> vector<2x128xf32>
    %c0_107 = arith.constant 0 : index
    %c0_108 = arith.constant 0 : index
    %421 = vector.load %arg14[%c0_107, %c0_108] : memref<1x128xf32, #tpu.memory_space<vmem>>, vector<1x128xf32>
    %422 = vector.broadcast %421 : vector<1x128xf32> to vector<2x128xf32>
    %423 = arith.addf %420, %422 : vector<2x128xf32>
    %c0_109 = arith.constant 0 : index
    %c0_110 = arith.constant 0 : index
    %424 = vector.load %arg15[%c0_109, %c0_110] : memref<2x128xf32, #tpu.memory_space<vmem>>, vector<2x128xf32>
    tpu.vector_store %arg15[%c0_109, %c0_110], %423 {strides = array<i32>} : memref<2x128xf32, #tpu.memory_space<vmem>>, vector<2x128xf32>,
    return
  }
}

</mosaic_0001>

<llo_original>
// kernel: attn_encoder_snli.1
$region0: #{attn_encoder_snli.1}
  #allocation0 [shape = 'u32[]', space=smem, size = 0x4, offset = 0x4, fixed_abs, tag = 'smem constant byte address 0x4 - core index']
  #allocation1 [shape = 'u32[72,128]{1,0:T(1,128)}', space=vmem, size = 0x9000, scoped, tag = 'internal scratch']
  %s0 = inlined_call_operand.vmem [shape: s32[32,1], index: 0, kind: input, shape index: {}]
  %s1 = inlined_call_operand.vmem [shape: f32[128,32], index: 1, kind: input, shape index: {}]
  %s2 = inlined_call_operand.vmem [shape: f32[32,32], index: 2, kind: input, shape index: {}]
  %s3 = inlined_call_operand.vmem [shape: f32[1,32], index: 3, kind: input, shape index: {}]
  %s4 = inlined_call_operand.vmem [shape: f32[4,32,32], index: 4, kind: input, shape index: {}]
  %s5 = inlined_call_operand.vmem [shape: f32[4,32,32], index: 5, kind: input, shape index: {}]
  %s6 = inlined_call_operand.vmem [shape: f32[4,1,32], index: 6, kind: input, shape index: {}]
  %s7 = inlined_call_operand.vmem [shape: f32[32,16], index: 7, kind: input, shape index: {}]
  %s8 = inlined_call_operand.vmem [shape: f32[1,16], index: 8, kind: input, shape index: {}]
  %s9 = inlined_call_operand.vmem [shape: f32[128,32], index: 9, kind: input, shape index: {}]
  %s10 = inlined_call_operand.vmem [shape: f32[1,32], index: 10, kind: input, shape index: {}]
  %s11 = inlined_call_operand.vmem [shape: f32[2,32,32], index: 11, kind: input, shape index: {}]
  %s12 = inlined_call_operand.vmem [shape: f32[2,1,32], index: 12, kind: input, shape index: {}]
  %s13 = inlined_call_operand.vmem [shape: f32[32,128], index: 13, kind: input, shape index: {}]
  %s14 = inlined_call_operand.vmem [shape: f32[1,128], index: 14, kind: input, shape index: {}]
  %s15 = inlined_call_operand.vmem [shape: f32[2,128], index: 15, kind: output, shape index: {}]
  %s16 = sld [smem:[#allocation0]]
  $region70: #{attn_encoder_snli.1} parent=0
    _
  %s18 = ssub.s32 1, %s16
  %s19 = scalar_select 0, %s18, %s16
  // Predicated region
  $region2: #{attn_encoder_snli.1} parent=0 // pred_check
    _
  $region3: #{attn_encoder_snli.1} parent=0 // pred_check_branch
    %21 = sbr.rel (0) target = $region5
  $region4: #{attn_encoder_snli.1} parent=0 // pred_region
    _
  $region5: #{attn_encoder_snli.1} parent=0 // pred_fallthru
    _
  // Predicated region
  $region6: #{attn_encoder_snli.1} parent=0 // pred_check
    _
  $region7: #{attn_encoder_snli.1} parent=0 // pred_check_branch
    %23 = sbr.rel (0) target = $region9
  $region8: #{attn_encoder_snli.1} parent=0 // pred_region
    _
  $region9: #{attn_encoder_snli.1} parent=0 // pred_fallthru
    _
  // Predicated region
  $region10: #{attn_encoder_snli.1} parent=0 // pred_check
    _
  $region11: #{attn_encoder_snli.1} parent=0 // pred_check_branch
    %25 = sbr.rel (0) target = $region13
  $region12: #{attn_encoder_snli.1} parent=0 // pred_region
    _
  $region13: #{attn_encoder_snli.1} parent=0 // pred_fallthru
    _
  // Predicated region
  $region14: #{attn_encoder_snli.1} parent=0 // pred_check
    _
  $region15: #{attn_encoder_snli.1} parent=0 // pred_check_branch
    %27 = sbr.rel (0) target = $region17
  $region16: #{attn_encoder_snli.1} parent=0 // pred_region
    _
  $region17: #{attn_encoder_snli.1} parent=0 // pred_fallthru
    _
  // Predicated region
  $region18: #{attn_encoder_snli.1} parent=0 // pred_check
    _
  $region19: #{attn_encoder_snli.1} parent=0 // pred_check_branch
    %29 = sbr.rel (0) target = $region21
  $region20: #{attn_encoder_snli.1} parent=0 // pred_region
    _
  $region21: #{attn_encoder_snli.1} parent=0 // pred_fallthru
    _
  // Predicated region
  $region22: #{attn_encoder_snli.1} parent=0 // pred_check
    _
  $region23: #{attn_encoder_snli.1} parent=0 // pred_check_branch
    %31 = sbr.rel (0) target = $region25
  $region24: #{attn_encoder_snli.1} parent=0 // pred_region
    _
  $region25: #{attn_encoder_snli.1} parent=0 // pred_fallthru
    _
  // Predicated region
  $region26: #{attn_encoder_snli.1} parent=0 // pred_check
    _
  $region27: #{attn_encoder_snli.1} parent=0 // pred_check_branch
    %33 = sbr.rel (0) target = $region29
  $region28: #{attn_encoder_snli.1} parent=0 // pred_region
    _
  $region29: #{attn_encoder_snli.1} parent=0 // pred_fallthru
    _
  // Predicated region
  $region30: #{attn_encoder_snli.1} parent=0 // pred_check
    _
  $region31: #{attn_encoder_snli.1} parent=0 // pred_check_branch
    %35 = sbr.rel (0) target = $region33
  $region32: #{attn_encoder_snli.1} parent=0 // pred_region
    _
  $region33: #{attn_encoder_snli.1} parent=0 // pred_fallthru
    _
  // Predicated region
  $region34: #{attn_encoder_snli.1} parent=0 // pred_check
    _
  $region35: #{attn_encoder_snli.1} parent=0 // pred_check_branch
    %37 = sbr.rel (0) target = $region37
  $region36: #{attn_encoder_snli.1} parent=0 // pred_region
    _
  $region37: #{attn_encoder_snli.1} parent=0 // pred_fallthru
    _
  // Predicated region
  $region38: #{attn_encoder_snli.1} parent=0 // pred_check
    _
  $region39: #{attn_encoder_snli.1} parent=0 // pred_check_branch
    %39 = sbr.rel (0) target = $region41
  $region40: #{attn_encoder_snli.1} parent=0 // pred_region
    _
  $region41: #{attn_encoder_snli.1} parent=0 // pred_fallthru
    _
  // Predicated region
  $region42: #{attn_encoder_snli.1} parent=0 // pred_check
    _
  $region43: #{attn_encoder_snli.1} parent=0 // pred_check_branch
    %41 = sbr.rel (0) target = $region45
  $region44: #{attn_encoder_snli.1} parent=0 // pred_region
    _
  $region45: #{attn_encoder_snli.1} parent=0 // pred_fallthru
    _
  // Predicated region
  $region46: #{attn_encoder_snli.1} parent=0 // pred_check
    _
  $region47: #{attn_encoder_snli.1} parent=0 // pred_check_branch
    %43 = sbr.rel (0) target = $region49
  $region48: #{attn_encoder_snli.1} parent=0 // pred_region
    _
  $region49: #{attn_encoder_snli.1} parent=0 // pred_fallthru
    _
  // Predicated region
  $region50: #{attn_encoder_snli.1} parent=0 // pred_check
    _
  $region51: #{attn_encoder_snli.1} parent=0 // pred_check_branch
    %45 = sbr.rel (0) target = $region53
  $region52: #{attn_encoder_snli.1} parent=0 // pred_region
    _
  $region53: #{attn_encoder_snli.1} parent=0 // pred_fallthru
    _
  // Predicated region
  $region54: #{attn_encoder_snli.1} parent=0 // pred_check
    _
  $region55: #{attn_encoder_snli.1} parent=0 // pred_check_branch
    %47 = sbr.rel (0) target = $region57
  $region56: #{attn_encoder_snli.1} parent=0 // pred_region
    _
  $region57: #{attn_encoder_snli.1} parent=0 // pred_fallthru
    _
  // Predicated region
  $region58: #{attn_encoder_snli.1} parent=0 // pred_check
    _
  $region59: #{attn_encoder_snli.1} parent=0 // pred_check_branch
    %49 = sbr.rel (0) target = $region61
  $region60: #{attn_encoder_snli.1} parent=0 // pred_region
    _
  $region61: #{attn_encoder_snli.1} parent=0 // pred_fallthru
    _
  %v50 = vld [vmem:[%s0] sm:$0xff]
  %v51 = vld [vmem:[%s0 + $0x8] sm:$0xff]
  %v52 = vld [vmem:[%s0 + $0x10] sm:$0xff]
  %v53 = vld [vmem:[%s0 + $0x18] sm:$0xff]
  %v54 = vlaneseq
  %v55 = vand.u32 %v54, 127
  %56 = vset.pattern.permute.xlu0 0
  %57 = vperm.xlu0 %56, %v50
  %v58 = vpop.permute.xlu0 %57
  %59 = vset.pattern.permute.xlu0 0
  %60 = vperm.xlu0 %59, %v51
  %v61 = vpop.permute.xlu0 %60
  %62 = vset.pattern.permute.xlu0 0
  %63 = vperm.xlu0 %62, %v52
  %v64 = vpop.permute.xlu0 %63
  %65 = vset.pattern.permute.xlu0 0
  %66 = vperm.xlu0 %65, %v53
  %v67 = vpop.permute.xlu0 %66
  %vm68 = vcmp.eq.s32.totalorder %v55, %v58
  %vm69 = vcmp.eq.s32.totalorder %v55, %v61
  %vm70 = vcmp.eq.s32.totalorder %v55, %v64
  %vm71 = vcmp.eq.s32.totalorder %v55, %v67
  %v72 = vsel %vm68, 1, 0
  %v73 = vsel %vm69, 1, 0
  %v74 = vsel %vm70, 1, 0
  %v75 = vsel %vm71, 1, 0
  %v76 = vcvt.s32.f32 %v72
  %v77 = vcvt.s32.f32 %v73
  %v78 = vcvt.s32.f32 %v74
  %v79 = vcvt.s32.f32 %v75
  %v80 = vld [vmem:[%s1] sm:$0xff]
  %v81 = vld [vmem:[%s1 + $0x8] sm:$0xff]
  %v82 = vld [vmem:[%s1 + $0x10] sm:$0xff]
  %v83 = vld [vmem:[%s1 + $0x18] sm:$0xff]
  %v84 = vld [vmem:[%s1 + $0x20] sm:$0xff]
  %v85 = vld [vmem:[%s1 + $0x28] sm:$0xff]
  %v86 = vld [vmem:[%s1 + $0x30] sm:$0xff]
  %v87 = vld [vmem:[%s1 + $0x38] sm:$0xff]
  %v88 = vld [vmem:[%s1 + $0x40] sm:$0xff]
  %v89 = vld [vmem:[%s1 + $0x48] sm:$0xff]
  %v90 = vld [vmem:[%s1 + $0x50] sm:$0xff]
  %v91 = vld [vmem:[%s1 + $0x58] sm:$0xff]
  %v92 = vld [vmem:[%s1 + $0x60] sm:$0xff]
  %v93 = vld [vmem:[%s1 + $0x68] sm:$0xff]
  %v94 = vld [vmem:[%s1 + $0x70] sm:$0xff]
  %v95 = vld [vmem:[%s1 + $0x78] sm:$0xff]
  %96 = vmatpush.msra.mxu0 %v95
  %97 = vmatpush.msra.mxu0 %v94
  %98 = vmatpush.msra.mxu0 %v93
  %99 = vmatpush.msra.mxu0 %v92
  %100 = vmatpush.msra.mxu0 %v91
  %101 = vmatpush.msra.mxu0 %v90
  %102 = vmatpush.msra.mxu0 %v89
  %103 = vmatpush.msra.mxu0 %v88
  %104 = vmatpush.msra.mxu0 %v87
  %105 = vmatpush.msra.mxu0 %v86
  %106 = vmatpush.msra.mxu0 %v85
  %107 = vmatpush.msra.mxu0 %v84
  %108 = vmatpush.msra.mxu0 %v83
  %109 = vmatpush.msra.mxu0 %v82
  %110 = vmatpush.msra.mxu0 %v81
  %111 = vmatpush.msra.mxu0 %v80
  %112 = vmatmul.f32.gmra.mxu0 %v76
  %v113 = vpop.f32.mrf.mxu0
  %v114 = vadd.f32 0.0, %v113
  %115 = vmatmul.f32.gmra.mxu0 %v77
  %v116 = vpop.f32.mrf.mxu0
  %v117 = vadd.f32 0.0, %v116
  %118 = vmatmul.f32.gmra.mxu0 %v78
  %v119 = vpop.f32.mrf.mxu0
  %v120 = vadd.f32 0.0, %v119
  %121 = vmatmul.f32.gmra.mxu0 %v79
  %v122 = vpop.f32.mrf.mxu0
  %v123 = vadd.f32 0.0, %v122
  %124 = vdwg.mxu0
  %v125 = vld [vmem:[%s2] sm:$0xff]
  %v126 = vld [vmem:[%s2 + $0x8] sm:$0xff]
  %v127 = vld [vmem:[%s2 + $0x10] sm:$0xff]
  %v128 = vld [vmem:[%s2 + $0x18] sm:$0xff]
  %v129 = vld [vmem:[%s3] sm:$0x1]
  %v131 = vperm.slane %v129, 0
  %vm133 = vcmask 261120
  %v135 = vsel %vm133, %v114, 0
  %v138 = vsel %vm133, %v117, 0
  %v141 = vsel %vm133, %v120, 0
  %v144 = vsel %vm133, %v123, 0
  %146 = vmatpush.msra.mxu0 0.0
  %147 = vmatpush.msra.mxu0 0.0
  %148 = vmatpush.msra.mxu0 0.0
  %149 = vmatpush.msra.mxu0 0.0
  %150 = vmatpush.msra.mxu0 0.0
  %151 = vmatpush.msra.mxu0 0.0
  %152 = vmatpush.msra.mxu0 0.0
  %153 = vmatpush.msra.mxu0 0.0
  %154 = vmatpush.msra.mxu0 0.0
  %155 = vmatpush.msra.mxu0 0.0
  %156 = vmatpush.msra.mxu0 0.0
  %157 = vmatpush.msra.mxu0 0.0
  %158 = vmatpush.msra.mxu0 %v128
  %159 = vmatpush.msra.mxu0 %v127
  %160 = vmatpush.msra.mxu0 %v126
  %161 = vmatpush.msra.mxu0 %v125
  %162 = vmatmul.f32.gmra.mxu0 %v135
  %v163 = vpop.f32.mrf.mxu0
  %v164 = vadd.f32 %v131, %v163
  %165 = vmatmul.f32.gmra.mxu0 %v138
  %v166 = vpop.f32.mrf.mxu0
  %v167 = vadd.f32 %v131, %v166
  %168 = vmatmul.f32.gmra.mxu0 %v141
  %v169 = vpop.f32.mrf.mxu0
  %v170 = vadd.f32 %v131, %v169
  %171 = vmatmul.f32.gmra.mxu0 %v144
  %v172 = vpop.f32.mrf.mxu0
  %v173 = vadd.f32 %v131, %v172
  %174 = vdwg.mxu0
  %v175 = vmax.f32 %v164, 0.0
  %v176 = vmax.f32 %v167, 0.0
  %v177 = vmax.f32 %v170, 0.0
  %v178 = vmax.f32 %v173, 0.0
  %v179 = vld [vmem:[%s4] sm:$0xff]
  %v180 = vld [vmem:[%s4 + $0x8] sm:$0xff]
  %v181 = vld [vmem:[%s4 + $0x10] sm:$0xff]
  %v182 = vld [vmem:[%s4 + $0x18] sm:$0xff]
  %v183 = vld [vmem:[%s4 + $0x20] sm:$0xff]
  %v184 = vld [vmem:[%s4 + $0x28] sm:$0xff]
  %v185 = vld [vmem:[%s4 + $0x30] sm:$0xff]
  %v186 = vld [vmem:[%s4 + $0x38] sm:$0xff]
  %v187 = vld [vmem:[%s4 + $0x40] sm:$0xff]
  %v188 = vld [vmem:[%s4 + $0x48] sm:$0xff]
  %v189 = vld [vmem:[%s4 + $0x50] sm:$0xff]
  %v190 = vld [vmem:[%s4 + $0x58] sm:$0xff]
  %v191 = vld [vmem:[%s4 + $0x60] sm:$0xff]
  %v192 = vld [vmem:[%s4 + $0x68] sm:$0xff]
  %v193 = vld [vmem:[%s4 + $0x70] sm:$0xff]
  %v194 = vld [vmem:[%s4 + $0x78] sm:$0xff]
  %v195 = vld [vmem:[%s6] sm:$0x1]
  %v196 = vld [vmem:[%s6 + $0x1] sm:$0x1]
  %v197 = vld [vmem:[%s6 + $0x2] sm:$0x1]
  %v198 = vld [vmem:[%s6 + $0x3] sm:$0x1]
  %v200 = vperm.slane %v195, 0
  %v203 = vsel %vm133, %v175, 0
  %v206 = vsel %vm133, %v176, 0
  %v209 = vsel %vm133, %v177, 0
  %v212 = vsel %vm133, %v178, 0
  %214 = vmatpush.msra.mxu0 0.0
  %215 = vmatpush.msra.mxu0 0.0
  %216 = vmatpush.msra.mxu0 0.0
  %217 = vmatpush.msra.mxu0 0.0
  %218 = vmatpush.msra.mxu0 0.0
  %219 = vmatpush.msra.mxu0 0.0
  %220 = vmatpush.msra.mxu0 0.0
  %221 = vmatpush.msra.mxu0 0.0
  %222 = vmatpush.msra.mxu0 0.0
  %223 = vmatpush.msra.mxu0 0.0
  %224 = vmatpush.msra.mxu0 0.0
  %225 = vmatpush.msra.mxu0 0.0
  %226 = vmatpush.msra.mxu0 %v182
  %227 = vmatpush.msra.mxu0 %v181
  %228 = vmatpush.msra.mxu0 %v180
  %229 = vmatpush.msra.mxu0 %v179
  %230 = vmatmul.f32.gmra.mxu0 %v203
  %v231 = vpop.f32.mrf.mxu0
  %v232 = vadd.f32 %v200, %v231
  %233 = vmatmul.f32.gmra.mxu0 %v206
  %v234 = vpop.f32.mrf.mxu0
  %v235 = vadd.f32 %v200, %v234
  %236 = vmatmul.f32.gmra.mxu0 %v209
  %v237 = vpop.f32.mrf.mxu0
  %v238 = vadd.f32 %v200, %v237
  %239 = vmatmul.f32.gmra.mxu0 %v212
  %v240 = vpop.f32.mrf.mxu0
  %v241 = vadd.f32 %v200, %v240
  %242 = vdwg.mxu0
  %v247 = vrot.slane %v232, 4
  %v248 = vrot.slane %v235, 4
  %v249 = vrot.slane %v238, 4
  %v250 = vrot.slane %v241, 4
  %v256 = vperm.slane %v196, 0
  %258 = vmatpush.msra.mxu0 0.0
  %259 = vmatpush.msra.mxu0 0.0
  %260 = vmatpush.msra.mxu0 0.0
  %261 = vmatpush.msra.mxu0 0.0
  %262 = vmatpush.msra.mxu0 0.0
  %263 = vmatpush.msra.mxu0 0.0
  %264 = vmatpush.msra.mxu0 0.0
  %265 = vmatpush.msra.mxu0 0.0
  %266 = vmatpush.msra.mxu0 0.0
  %267 = vmatpush.msra.mxu0 0.0
  %268 = vmatpush.msra.mxu0 0.0
  %269 = vmatpush.msra.mxu0 0.0
  %270 = vmatpush.msra.mxu0 %v186
  %271 = vmatpush.msra.mxu0 %v185
  %272 = vmatpush.msra.mxu0 %v184
  %273 = vmatpush.msra.mxu0 %v183
  %274 = vmatmul.f32.gmra.mxu0 %v203
  %v275 = vpop.f32.mrf.mxu0
  %v276 = vadd.f32 %v256, %v275
  %277 = vmatmul.f32.gmra.mxu0 %v206
  %v278 = vpop.f32.mrf.mxu0
  %v279 = vadd.f32 %v256, %v278
  %280 = vmatmul.f32.gmra.mxu0 %v209
  %v281 = vpop.f32.mrf.mxu0
  %v282 = vadd.f32 %v256, %v281
  %283 = vmatmul.f32.gmra.mxu0 %v212
  %v284 = vpop.f32.mrf.mxu0
  %v285 = vadd.f32 %v256, %v284
  %286 = vdwg.mxu0
  %v291 = vrot.slane %v276, 4
  %v292 = vrot.slane %v279, 4
  %v293 = vrot.slane %v282, 4
  %v294 = vrot.slane %v285, 4
  %v300 = vperm.slane %v197, 0
  %302 = vmatpush.msra.mxu0 0.0
  %303 = vmatpush.msra.mxu0 0.0
  %304 = vmatpush.msra.mxu0 0.0
  %305 = vmatpush.msra.mxu0 0.0
  %306 = vmatpush.msra.mxu0 0.0
  %307 = vmatpush.msra.mxu0 0.0
  %308 = vmatpush.msra.mxu0 0.0
  %309 = vmatpush.msra.mxu0 0.0
  %310 = vmatpush.msra.mxu0 0.0
  %311 = vmatpush.msra.mxu0 0.0
  %312 = vmatpush.msra.mxu0 0.0
  %313 = vmatpush.msra.mxu0 0.0
  %314 = vmatpush.msra.mxu0 %v190
  %315 = vmatpush.msra.mxu0 %v189
  %316 = vmatpush.msra.mxu0 %v188
  %317 = vmatpush.msra.mxu0 %v187
  %318 = vmatmul.f32.gmra.mxu0 %v203
  %v319 = vpop.f32.mrf.mxu0
  %v320 = vadd.f32 %v300, %v319
  %321 = vmatmul.f32.gmra.mxu0 %v206
  %v322 = vpop.f32.mrf.mxu0
  %v323 = vadd.f32 %v300, %v322
  %324 = vmatmul.f32.gmra.mxu0 %v209
  %v325 = vpop.f32.mrf.mxu0
  %v326 = vadd.f32 %v300, %v325
  %327 = vmatmul.f32.gmra.mxu0 %v212
  %v328 = vpop.f32.mrf.mxu0
  %v329 = vadd.f32 %v300, %v328
  %330 = vdwg.mxu0
  %v335 = vrot.slane %v320, 4
  %v336 = vrot.slane %v323, 4
  %v337 = vrot.slane %v326, 4
  %v338 = vrot.slane %v329, 4
  %v344 = vperm.slane %v198, 0
  %346 = vmatpush.msra.mxu0 0.0
  %347 = vmatpush.msra.mxu0 0.0
  %348 = vmatpush.msra.mxu0 0.0
  %349 = vmatpush.msra.mxu0 0.0
  %350 = vmatpush.msra.mxu0 0.0
  %351 = vmatpush.msra.mxu0 0.0
  %352 = vmatpush.msra.mxu0 0.0
  %353 = vmatpush.msra.mxu0 0.0
  %354 = vmatpush.msra.mxu0 0.0
  %355 = vmatpush.msra.mxu0 0.0
  %356 = vmatpush.msra.mxu0 0.0
  %357 = vmatpush.msra.mxu0 0.0
  %358 = vmatpush.msra.mxu0 %v194
  %359 = vmatpush.msra.mxu0 %v193
  %360 = vmatpush.msra.mxu0 %v192
  %361 = vmatpush.msra.mxu0 %v191
  %362 = vmatmul.f32.gmra.mxu0 %v203
  %v363 = vpop.f32.mrf.mxu0
  %v364 = vadd.f32 %v344, %v363
  %365 = vmatmul.f32.gmra.mxu0 %v206
  %v366 = vpop.f32.mrf.mxu0
  %v367 = vadd.f32 %v344, %v366
  %368 = vmatmul.f32.gmra.mxu0 %v209
  %v369 = vpop.f32.mrf.mxu0
  %v370 = vadd.f32 %v344, %v369
  %371 = vmatmul.f32.gmra.mxu0 %v212
  %v372 = vpop.f32.mrf.mxu0
  %v373 = vadd.f32 %v344, %v372
  %374 = vdwg.mxu0
  %v379 = vrot.slane %v364, 4
  %v380 = vrot.slane %v367, 4
  %v381 = vrot.slane %v370, 4
  %v382 = vrot.slane %v373, 4
  %v387 = vld [vmem:[%s5] sm:$0xff]
  %v388 = vld [vmem:[%s5 + $0x8] sm:$0xff]
  %v389 = vld [vmem:[%s5 + $0x10] sm:$0xff]
  %v390 = vld [vmem:[%s5 + $0x18] sm:$0xff]
  %v391 = vld [vmem:[%s5 + $0x20] sm:$0xff]
  %v392 = vld [vmem:[%s5 + $0x28] sm:$0xff]
  %v393 = vld [vmem:[%s5 + $0x30] sm:$0xff]
  %v394 = vld [vmem:[%s5 + $0x38] sm:$0xff]
  %v395 = vld [vmem:[%s5 + $0x40] sm:$0xff]
  %v396 = vld [vmem:[%s5 + $0x48] sm:$0xff]
  %v397 = vld [vmem:[%s5 + $0x50] sm:$0xff]
  %v398 = vld [vmem:[%s5 + $0x58] sm:$0xff]
  %v399 = vld [vmem:[%s5 + $0x60] sm:$0xff]
  %v400 = vld [vmem:[%s5 + $0x68] sm:$0xff]
  %v401 = vld [vmem:[%s5 + $0x70] sm:$0xff]
  %v402 = vld [vmem:[%s5 + $0x78] sm:$0xff]
  %v404 = vsel %vm133, 0.0, 0
  %406 = vmatpush.msra.mxu0 0.0
  %407 = vmatpush.msra.mxu0 0.0
  %408 = vmatpush.msra.mxu0 0.0
  %409 = vmatpush.msra.mxu0 0.0
  %410 = vmatpush.msra.mxu0 0.0
  %411 = vmatpush.msra.mxu0 0.0
  %412 = vmatpush.msra.mxu0 0.0
  %413 = vmatpush.msra.mxu0 0.0
  %414 = vmatpush.msra.mxu0 0.0
  %415 = vmatpush.msra.mxu0 0.0
  %416 = vmatpush.msra.mxu0 0.0
  %417 = vmatpush.msra.mxu0 0.0
  %418 = vmatpush.msra.mxu0 %v390
  %419 = vmatpush.msra.mxu0 %v389
  %420 = vmatpush.msra.mxu0 %v388
  %421 = vmatpush.msra.mxu0 %v387
  %422 = vmatmul.f32.gmra.mxu0 %v404
  %v423 = vpop.f32.mrf.mxu0
  %v424 = vadd.f32 0.0, %v423
  %425 = vdwg.mxu0
  %v426 = vadd.f32 %v232, %v424
  %v427 = vxor.u32 %v426, 2147483648
  %v428 = vmul.f32 %v427, 1.442695
  %v429 = vpow.pop %v428
  %v430 = vadd.f32 %v429, 1.0
  %v431 = vrcp.pop %v430
  %v432 = vmul.f32 %v430, %v431
  %v433 = vsub.f32 1.0, %v432
  %v434 = vmul.f32 %v431, %v433
  %v435 = vadd.f32 %v431, %v434
  %vm436 = vweird.f32 %v430
  %vm437 = vweird.f32 %v431
  %vm438 = vmor %vm436, %vm437
  %v439 = vsel %vm438, %v431, %v435
  %v440 = vand.u32 2147483647, %v430
  %vm441 = vcmp.eq.f32.partialorder %v440, 8.507059e+37
  %v442 = vand.u32 %v430, 2147483648
  %v443 = vor.u32 1.1754944e-38, %v442
  %v444 = vsel %vm441, %v443, %v439
  %v445 = vmul.f32 1.0, %v444
  %446 = vmatpush.msra.mxu0 0.0
  %447 = vmatpush.msra.mxu0 0.0
  %448 = vmatpush.msra.mxu0 0.0
  %449 = vmatpush.msra.mxu0 0.0
  %450 = vmatpush.msra.mxu0 0.0
  %451 = vmatpush.msra.mxu0 0.0
  %452 = vmatpush.msra.mxu0 0.0
  %453 = vmatpush.msra.mxu0 0.0
  %454 = vmatpush.msra.mxu0 0.0
  %455 = vmatpush.msra.mxu0 0.0
  %456 = vmatpush.msra.mxu0 0.0
  %457 = vmatpush.msra.mxu0 0.0
  %458 = vmatpush.msra.mxu0 %v394
  %459 = vmatpush.msra.mxu0 %v393
  %460 = vmatpush.msra.mxu0 %v392
  %461 = vmatpush.msra.mxu0 %v391
  %462 = vmatmul.f32.gmra.mxu0 %v404
  %v463 = vpop.f32.mrf.mxu0
  %v464 = vadd.f32 0.0, %v463
  %465 = vdwg.mxu0
  %v466 = vadd.f32 %v276, %v464
  %v467 = vxor.u32 %v466, 2147483648
  %v468 = vmul.f32 %v467, 1.442695
  %v469 = vpow.pop %v468
  %v470 = vadd.f32 %v469, 1.0
  %v471 = vrcp.pop %v470
  %v472 = vmul.f32 %v470, %v471
  %v473 = vsub.f32 1.0, %v472
  %v474 = vmul.f32 %v471, %v473
  %v475 = vadd.f32 %v471, %v474
  %vm476 = vweird.f32 %v470
  %vm477 = vweird.f32 %v471
  %vm478 = vmor %vm476, %vm477
  %v479 = vsel %vm478, %v471, %v475
  %v480 = vand.u32 2147483647, %v470
  %vm481 = vcmp.eq.f32.partialorder %v480, 8.507059e+37
  %v482 = vand.u32 %v470, 2147483648
  %v483 = vor.u32 1.1754944e-38, %v482
  %v484 = vsel %vm481, %v483, %v479
  %v485 = vmul.f32 1.0, %v484
  %486 = vmatpush.msra.mxu0 0.0
  %487 = vmatpush.msra.mxu0 0.0
  %488 = vmatpush.msra.mxu0 0.0
  %489 = vmatpush.msra.mxu0 0.0
  %490 = vmatpush.msra.mxu0 0.0
  %491 = vmatpush.msra.mxu0 0.0
  %492 = vmatpush.msra.mxu0 0.0
  %493 = vmatpush.msra.mxu0 0.0
  %494 = vmatpush.msra.mxu0 0.0
  %495 = vmatpush.msra.mxu0 0.0
  %496 = vmatpush.msra.mxu0 0.0
  %497 = vmatpush.msra.mxu0 0.0
  %498 = vmatpush.msra.mxu0 %v398
  %499 = vmatpush.msra.mxu0 %v397
  %500 = vmatpush.msra.mxu0 %v396
  %501 = vmatpush.msra.mxu0 %v395
  %502 = vmatmul.f32.gmra.mxu0 %v404
  %v503 = vpop.f32.mrf.mxu0
  %v504 = vadd.f32 0.0, %v503
  %505 = vdwg.mxu0
  %v506 = vadd.f32 %v320, %v504
  %v507 = vtanh.pop %v506
  %508 = vmatpush.msra.mxu0 0.0
  %509 = vmatpush.msra.mxu0 0.0
  %510 = vmatpush.msra.mxu0 0.0
  %511 = vmatpush.msra.mxu0 0.0
  %512 = vmatpush.msra.mxu0 0.0
  %513 = vmatpush.msra.mxu0 0.0
  %514 = vmatpush.msra.mxu0 0.0
  %515 = vmatpush.msra.mxu0 0.0
  %516 = vmatpush.msra.mxu0 0.0
  %517 = vmatpush.msra.mxu0 0.0
  %518 = vmatpush.msra.mxu0 0.0
  %519 = vmatpush.msra.mxu0 0.0
  %520 = vmatpush.msra.mxu0 %v402
  %521 = vmatpush.msra.mxu0 %v401
  %522 = vmatpush.msra.mxu0 %v400
  %523 = vmatpush.msra.mxu0 %v399
  %524 = vmatmul.f32.gmra.mxu0 %v404
  %v525 = vpop.f32.mrf.mxu0
  %v526 = vadd.f32 0.0, %v525
  %527 = vdwg.mxu0
  %v528 = vadd.f32 %v364, %v526
  %v529 = vxor.u32 %v528, 2147483648
  %v530 = vmul.f32 %v529, 1.442695
  %v531 = vpow.pop %v530
  %v532 = vadd.f32 %v531, 1.0
  %v533 = vrcp.pop %v532
  %v534 = vmul.f32 %v532, %v533
  %v535 = vsub.f32 1.0, %v534
  %v536 = vmul.f32 %v533, %v535
  %v537 = vadd.f32 %v533, %v536
  %vm538 = vweird.f32 %v532
  %vm539 = vweird.f32 %v533
  %vm540 = vmor %vm538, %vm539
  %v541 = vsel %vm540, %v533, %v537
  %v542 = vand.u32 2147483647, %v532
  %vm543 = vcmp.eq.f32.partialorder %v542, 8.507059e+37
  %v544 = vand.u32 %v532, 2147483648
  %v545 = vor.u32 1.1754944e-38, %v544
  %v546 = vsel %vm543, %v545, %v541
  %v547 = vmul.f32 1.0, %v546
  %v548 = vmul.f32 %v485, 0.0
  %v549 = vmul.f32 %v445, %v507
  %v550 = vadd.f32 %v548, %v549
  %v551 = vtanh.pop %v550
  %v552 = vmul.f32 %v547, %v551
  %v554 = vsel %vm133, %v552, 0
  %556 = vmatpush.msra.mxu0 0.0
  %557 = vmatpush.msra.mxu0 0.0
  %558 = vmatpush.msra.mxu0 0.0
  %559 = vmatpush.msra.mxu0 0.0
  %560 = vmatpush.msra.mxu0 0.0
  %561 = vmatpush.msra.mxu0 0.0
  %562 = vmatpush.msra.mxu0 0.0
  %563 = vmatpush.msra.mxu0 0.0
  %564 = vmatpush.msra.mxu0 0.0
  %565 = vmatpush.msra.mxu0 0.0
  %566 = vmatpush.msra.mxu0 0.0
  %567 = vmatpush.msra.mxu0 0.0
  %568 = vmatpush.msra.mxu0 %v390
  %569 = vmatpush.msra.mxu0 %v389
  %570 = vmatpush.msra.mxu0 %v388
  %571 = vmatpush.msra.mxu0 %v387
  %572 = vmatmul.f32.gmra.mxu0 %v554
  %v573 = vpop.f32.mrf.mxu0
  %v574 = vadd.f32 0.0, %v573
  %575 = vdwg.mxu0
  %v576 = vadd.f32 %v247, %v574
  %v577 = vxor.u32 %v576, 2147483648
  %v578 = vmul.f32 %v577, 1.442695
  %v579 = vpow.pop %v578
  %v580 = vadd.f32 %v579, 1.0
  %v581 = vrcp.pop %v580
  %v582 = vmul.f32 %v580, %v581
  %v583 = vsub.f32 1.0, %v582
  %v584 = vmul.f32 %v581, %v583
  %v585 = vadd.f32 %v581, %v584
  %vm586 = vweird.f32 %v580
  %vm587 = vweird.f32 %v581
  %vm588 = vmor %vm586, %vm587
  %v589 = vsel %vm588, %v581, %v585
  %v590 = vand.u32 2147483647, %v580
  %vm591 = vcmp.eq.f32.partialorder %v590, 8.507059e+37
  %v592 = vand.u32 %v580, 2147483648
  %v593 = vor.u32 1.1754944e-38, %v592
  %v594 = vsel %vm591, %v593, %v589
  %v595 = vmul.f32 1.0, %v594
  %596 = vmatpush.msra.mxu0 0.0
  %597 = vmatpush.msra.mxu0 0.0
  %598 = vmatpush.msra.mxu0 0.0
  %599 = vmatpush.msra.mxu0 0.0
  %600 = vmatpush.msra.mxu0 0.0
  %601 = vmatpush.msra.mxu0 0.0
  %602 = vmatpush.msra.mxu0 0.0
  %603 = vmatpush.msra.mxu0 0.0
  %604 = vmatpush.msra.mxu0 0.0
  %605 = vmatpush.msra.mxu0 0.0
  %606 = vmatpush.msra.mxu0 0.0
  %607 = vmatpush.msra.mxu0 0.0
  %608 = vmatpush.msra.mxu0 %v394
  %609 = vmatpush.msra.mxu0 %v393
  %610 = vmatpush.msra.mxu0 %v392
  %611 = vmatpush.msra.mxu0 %v391
  %612 = vmatmul.f32.gmra.mxu0 %v554
  %v613 = vpop.f32.mrf.mxu0
  %v614 = vadd.f32 0.0, %v613
  %615 = vdwg.mxu0
  %v616 = vadd.f32 %v291, %v614
  %v617 = vxor.u32 %v616, 2147483648
  %v618 = vmul.f32 %v617, 1.442695
  %v619 = vpow.pop %v618
  %v620 = vadd.f32 %v619, 1.0
  %v621 = vrcp.pop %v620
  %v622 = vmul.f32 %v620, %v621
  %v623 = vsub.f32 1.0, %v622
  %v624 = vmul.f32 %v621, %v623
  %v625 = vadd.f32 %v621, %v624
  %vm626 = vweird.f32 %v620
  %vm627 = vweird.f32 %v621
  %vm628 = vmor %vm626, %vm627
  %v629 = vsel %vm628, %v621, %v625
  %v630 = vand.u32 2147483647, %v620
  %vm631 = vcmp.eq.f32.partialorder %v630, 8.507059e+37
  %v632 = vand.u32 %v620, 2147483648
  %v633 = vor.u32 1.1754944e-38, %v632
  %v634 = vsel %vm631, %v633, %v629
  %v635 = vmul.f32 1.0, %v634
  %636 = vmatpush.msra.mxu0 0.0
  %637 = vmatpush.msra.mxu0 0.0
  %638 = vmatpush.msra.mxu0 0.0
  %639 = vmatpush.msra.mxu0 0.0
  %640 = vmatpush.msra.mxu0 0.0
  %641 = vmatpush.msra.mxu0 0.0
  %642 = vmatpush.msra.mxu0 0.0
  %643 = vmatpush.msra.mxu0 0.0
  %644 = vmatpush.msra.mxu0 0.0
  %645 = vmatpush.msra.mxu0 0.0
  %646 = vmatpush.msra.mxu0 0.0
  %647 = vmatpush.msra.mxu0 0.0
  %648 = vmatpush.msra.mxu0 %v398
  %649 = vmatpush.msra.mxu0 %v397
  %650 = vmatpush.msra.mxu0 %v396
  %651 = vmatpush.msra.mxu0 %v395
  %652 = vmatmul.f32.gmra.mxu0 %v554
  %v653 = vpop.f32.mrf.mxu0
  %v654 = vadd.f32 0.0, %v653
  %655 = vdwg.mxu0
  %v656 = vadd.f32 %v335, %v654
  %v657 = vtanh.pop %v656
  %658 = vmatpush.msra.mxu0 0.0
  %659 = vmatpush.msra.mxu0 0.0
  %660 = vmatpush.msra.mxu0 0.0
  %661 = vmatpush.msra.mxu0 0.0
  %662 = vmatpush.msra.mxu0 0.0
  %663 = vmatpush.msra.mxu0 0.0
  %664 = vmatpush.msra.mxu0 0.0
  %665 = vmatpush.msra.mxu0 0.0
  %666 = vmatpush.msra.mxu0 0.0
  %667 = vmatpush.msra.mxu0 0.0
  %668 = vmatpush.msra.mxu0 0.0
  %669 = vmatpush.msra.mxu0 0.0
  %670 = vmatpush.msra.mxu0 %v402
  %671 = vmatpush.msra.mxu0 %v401
  %672 = vmatpush.msra.mxu0 %v400
  %673 = vmatpush.msra.mxu0 %v399
  %674 = vmatmul.f32.gmra.mxu0 %v554
  %v675 = vpop.f32.mrf.mxu0
  %v676 = vadd.f32 0.0, %v675
  %677 = vdwg.mxu0
  %v678 = vadd.f32 %v379, %v676
  %v679 = vxor.u32 %v678, 2147483648
  %v680 = vmul.f32 %v679, 1.442695
  %v681 = vpow.pop %v680
  %v682 = vadd.f32 %v681, 1.0
  %v683 = vrcp.pop %v682
  %v684 = vmul.f32 %v682, %v683
  %v685 = vsub.f32 1.0, %v684
  %v686 = vmul.f32 %v683, %v685
  %v687 = vadd.f32 %v683, %v686
  %vm688 = vweird.f32 %v682
  %vm689 = vweird.f32 %v683
  %vm690 = vmor %vm688, %vm689
  %v691 = vsel %vm690, %v683, %v687
  %v692 = vand.u32 2147483647, %v682
  %vm693 = vcmp.eq.f32.partialorder %v692, 8.507059e+37
  %v694 = vand.u32 %v682, 2147483648
  %v695 = vor.u32 1.1754944e-38, %v694
  %v696 = vsel %vm693, %v695, %v691
  %v697 = vmul.f32 1.0, %v696
  %v698 = vmul.f32 %v635, %v550
  %v699 = vmul.f32 %v595, %v657
  %v700 = vadd.f32 %v698, %v699
  %v701 = vtanh.pop %v700
  %v702 = vmul.f32 %v697, %v701
  %v704 = vsel %vm133, %v702, 0
  %706 = vmatpush.msra.mxu0 0.0
  %707 = vmatpush.msra.mxu0 0.0
  %708 = vmatpush.msra.mxu0 0.0
  %709 = vmatpush.msra.mxu0 0.0
  %710 = vmatpush.msra.mxu0 0.0
  %711 = vmatpush.msra.mxu0 0.0
  %712 = vmatpush.msra.mxu0 0.0
  %713 = vmatpush.msra.mxu0 0.0
  %714 = vmatpush.msra.mxu0 0.0
  %715 = vmatpush.msra.mxu0 0.0
  %716 = vmatpush.msra.mxu0 0.0
  %717 = vmatpush.msra.mxu0 0.0
  %718 = vmatpush.msra.mxu0 %v390
  %719 = vmatpush.msra.mxu0 %v389
  %720 = vmatpush.msra.mxu0 %v388
  %721 = vmatpush.msra.mxu0 %v387
  %722 = vmatmul.f32.gmra.mxu0 %v704
  %v723 = vpop.f32.mrf.mxu0
  %v724 = vadd.f32 0.0, %v723
  %725 = vdwg.mxu0
  %v726 = vadd.f32 %v235, %v724
  %v727 = vxor.u32 %v726, 2147483648
  %v728 = vmul.f32 %v727, 1.442695
  %v729 = vpow.pop %v728
  %v730 = vadd.f32 %v729, 1.0
  %v731 = vrcp.pop %v730
  %v732 = vmul.f32 %v730, %v731
  %v733 = vsub.f32 1.0, %v732
  %v734 = vmul.f32 %v731, %v733
  %v735 = vadd.f32 %v731, %v734
  %vm736 = vweird.f32 %v730
  %vm737 = vweird.f32 %v731
  %vm738 = vmor %vm736, %vm737
  %v739 = vsel %vm738, %v731, %v735
  %v740 = vand.u32 2147483647, %v730
  %vm741 = vcmp.eq.f32.partialorder %v740, 8.507059e+37
  %v742 = vand.u32 %v730, 2147483648
  %v743 = vor.u32 1.1754944e-38, %v742
  %v744 = vsel %vm741, %v743, %v739
  %v745 = vmul.f32 1.0, %v744
  %746 = vmatpush.msra.mxu0 0.0
  %747 = vmatpush.msra.mxu0 0.0
  %748 = vmatpush.msra.mxu0 0.0
  %749 = vmatpush.msra.mxu0 0.0
  %750 = vmatpush.msra.mxu0 0.0
  %751 = vmatpush.msra.mxu0 0.0
  %752 = vmatpush.msra.mxu0 0.0
  %753 = vmatpush.msra.mxu0 0.0
  %754 = vmatpush.msra.mxu0 0.0
  %755 = vmatpush.msra.mxu0 0.0
  %756 = vmatpush.msra.mxu0 0.0
  %757 = vmatpush.msra.mxu0 0.0
  %758 = vmatpush.msra.mxu0 %v394
  %759 = vmatpush.msra.mxu0 %v393
  %760 = vmatpush.msra.mxu0 %v392
  %761 = vmatpush.msra.mxu0 %v391
  %762 = vmatmul.f32.gmra.mxu0 %v704
  %v763 = vpop.f32.mrf.mxu0
  %v764 = vadd.f32 0.0, %v763
  %765 = vdwg.mxu0
  %v766 = vadd.f32 %v279, %v764
  %v767 = vxor.u32 %v766, 2147483648
  %v768 = vmul.f32 %v767, 1.442695
  %v769 = vpow.pop %v768
  %v770 = vadd.f32 %v769, 1.0
  %v771 = vrcp.pop %v770
  %v772 = vmul.f32 %v770, %v771
  %v773 = vsub.f32 1.0, %v772
  %v774 = vmul.f32 %v771, %v773
  %v775 = vadd.f32 %v771, %v774
  %vm776 = vweird.f32 %v770
  %vm777 = vweird.f32 %v771
  %vm778 = vmor %vm776, %vm777
  %v779 = vsel %vm778, %v771, %v775
  %v780 = vand.u32 2147483647, %v770
  %vm781 = vcmp.eq.f32.partialorder %v780, 8.507059e+37
  %v782 = vand.u32 %v770, 2147483648
  %v783 = vor.u32 1.1754944e-38, %v782
  %v784 = vsel %vm781, %v783, %v779
  %v785 = vmul.f32 1.0, %v784
  %786 = vmatpush.msra.mxu0 0.0
  %787 = vmatpush.msra.mxu0 0.0
  %788 = vmatpush.msra.mxu0 0.0
  %789 = vmatpush.msra.mxu0 0.0
  %790 = vmatpush.msra.mxu0 0.0
  %791 = vmatpush.msra.mxu0 0.0
  %792 = vmatpush.msra.mxu0 0.0
  %793 = vmatpush.msra.mxu0 0.0
  %794 = vmatpush.msra.mxu0 0.0
  %795 = vmatpush.msra.mxu0 0.0
  %796 = vmatpush.msra.mxu0 0.0
  %797 = vmatpush.msra.mxu0 0.0
  %798 = vmatpush.msra.mxu0 %v398
  %799 = vmatpush.msra.mxu0 %v397
  %800 = vmatpush.msra.mxu0 %v396
  %801 = vmatpush.msra.mxu0 %v395
  %802 = vmatmul.f32.gmra.mxu0 %v704
  %v803 = vpop.f32.mrf.mxu0
  %v804 = vadd.f32 0.0, %v803
  %805 = vdwg.mxu0
  %v806 = vadd.f32 %v323, %v804
  %v807 = vtanh.pop %v806
  %808 = vmatpush.msra.mxu0 0.0
  %809 = vmatpush.msra.mxu0 0.0
  %810 = vmatpush.msra.mxu0 0.0
  %811 = vmatpush.msra.mxu0 0.0
  %812 = vmatpush.msra.mxu0 0.0
  %813 = vmatpush.msra.mxu0 0.0
  %814 = vmatpush.msra.mxu0 0.0
  %815 = vmatpush.msra.mxu0 0.0
  %816 = vmatpush.msra.mxu0 0.0
  %817 = vmatpush.msra.mxu0 0.0
  %818 = vmatpush.msra.mxu0 0.0
  %819 = vmatpush.msra.mxu0 0.0
  %820 = vmatpush.msra.mxu0 %v402
  %821 = vmatpush.msra.mxu0 %v401
  %822 = vmatpush.msra.mxu0 %v400
  %823 = vmatpush.msra.mxu0 %v399
  %824 = vmatmul.f32.gmra.mxu0 %v704
  %v825 = vpop.f32.mrf.mxu0
  %v826 = vadd.f32 0.0, %v825
  %827 = vdwg.mxu0
  %v828 = vadd.f32 %v367, %v826
  %v829 = vxor.u32 %v828, 2147483648
  %v830 = vmul.f32 %v829, 1.442695
  %v831 = vpow.pop %v830
  %v832 = vadd.f32 %v831, 1.0
  %v833 = vrcp.pop %v832
  %v834 = vmul.f32 %v832, %v833
  %v835 = vsub.f32 1.0, %v834
  %v836 = vmul.f32 %v833, %v835
  %v837 = vadd.f32 %v833, %v836
  %vm838 = vweird.f32 %v832
  %vm839 = vweird.f32 %v833
  %vm840 = vmor %vm838, %vm839
  %v841 = vsel %vm840, %v833, %v837
  %v842 = vand.u32 2147483647, %v832
  %vm843 = vcmp.eq.f32.partialorder %v842, 8.507059e+37
  %v844 = vand.u32 %v832, 2147483648
  %v845 = vor.u32 1.1754944e-38, %v844
  %v846 = vsel %vm843, %v845, %v841
  %v847 = vmul.f32 1.0, %v846
  %v848 = vmul.f32 %v785, %v700
  %v849 = vmul.f32 %v745, %v807
  %v850 = vadd.f32 %v848, %v849
  %v851 = vtanh.pop %v850
  %v852 = vmul.f32 %v847, %v851
  %v854 = vsel %vm133, %v852, 0
  %856 = vmatpush.msra.mxu0 0.0
  %857 = vmatpush.msra.mxu0 0.0
  %858 = vmatpush.msra.mxu0 0.0
  %859 = vmatpush.msra.mxu0 0.0
  %860 = vmatpush.msra.mxu0 0.0
  %861 = vmatpush.msra.mxu0 0.0
  %862 = vmatpush.msra.mxu0 0.0
  %863 = vmatpush.msra.mxu0 0.0
  %864 = vmatpush.msra.mxu0 0.0
  %865 = vmatpush.msra.mxu0 0.0
  %866 = vmatpush.msra.mxu0 0.0
  %867 = vmatpush.msra.mxu0 0.0
  %868 = vmatpush.msra.mxu0 %v390
  %869 = vmatpush.msra.mxu0 %v389
  %870 = vmatpush.msra.mxu0 %v388
  %871 = vmatpush.msra.mxu0 %v387
  %872 = vmatmul.f32.gmra.mxu0 %v854
  %v873 = vpop.f32.mrf.mxu0
  %v874 = vadd.f32 0.0, %v873
  %875 = vdwg.mxu0
  %v876 = vadd.f32 %v248, %v874
  %v877 = vxor.u32 %v876, 2147483648
  %v878 = vmul.f32 %v877, 1.442695
  %v879 = vpow.pop %v878
  %v880 = vadd.f32 %v879, 1.0
  %v881 = vrcp.pop %v880
  %v882 = vmul.f32 %v880, %v881
  %v883 = vsub.f32 1.0, %v882
  %v884 = vmul.f32 %v881, %v883
  %v885 = vadd.f32 %v881, %v884
  %vm886 = vweird.f32 %v880
  %vm887 = vweird.f32 %v881
  %vm888 = vmor %vm886, %vm887
  %v889 = vsel %vm888, %v881, %v885
  %v890 = vand.u32 2147483647, %v880
  %vm891 = vcmp.eq.f32.partialorder %v890, 8.507059e+37
  %v892 = vand.u32 %v880, 2147483648
  %v893 = vor.u32 1.1754944e-38, %v892
  %v894 = vsel %vm891, %v893, %v889
  %v895 = vmul.f32 1.0, %v894
  %896 = vmatpush.msra.mxu0 0.0
  %897 = vmatpush.msra.mxu0 0.0
  %898 = vmatpush.msra.mxu0 0.0
  %899 = vmatpush.msra.mxu0 0.0
  %900 = vmatpush.msra.mxu0 0.0
  %901 = vmatpush.msra.mxu0 0.0
  %902 = vmatpush.msra.mxu0 0.0
  %903 = vmatpush.msra.mxu0 0.0
  %904 = vmatpush.msra.mxu0 0.0
  %905 = vmatpush.msra.mxu0 0.0
  %906 = vmatpush.msra.mxu0 0.0
  %907 = vmatpush.msra.mxu0 0.0
  %908 = vmatpush.msra.mxu0 %v394
  %909 = vmatpush.msra.mxu0 %v393
  %910 = vmatpush.msra.mxu0 %v392
  %911 = vmatpush.msra.mxu0 %v391
  %912 = vmatmul.f32.gmra.mxu0 %v854
  %v913 = vpop.f32.mrf.mxu0
  %v914 = vadd.f32 0.0, %v913
  %915 = vdwg.mxu0
  %v916 = vadd.f32 %v292, %v914
  %v917 = vxor.u32 %v916, 2147483648
  %v918 = vmul.f32 %v917, 1.442695
  %v919 = vpow.pop %v918
  %v920 = vadd.f32 %v919, 1.0
  %v921 = vrcp.pop %v920
  %v922 = vmul.f32 %v920, %v921
  %v923 = vsub.f32 1.0, %v922
  %v924 = vmul.f32 %v921, %v923
  %v925 = vadd.f32 %v921, %v924
  %vm926 = vweird.f32 %v920
  %vm927 = vweird.f32 %v921
  %vm928 = vmor %vm926, %vm927
  %v929 = vsel %vm928, %v921, %v925
  %v930 = vand.u32 2147483647, %v920
  %vm931 = vcmp.eq.f32.partialorder %v930, 8.507059e+37
  %v932 = vand.u32 %v920, 2147483648
  %v933 = vor.u32 1.1754944e-38, %v932
  %v934 = vsel %vm931, %v933, %v929
  %v935 = vmul.f32 1.0, %v934
  %936 = vmatpush.msra.mxu0 0.0
  %937 = vmatpush.msra.mxu0 0.0
  %938 = vmatpush.msra.mxu0 0.0
  %939 = vmatpush.msra.mxu0 0.0
  %940 = vmatpush.msra.mxu0 0.0
  %941 = vmatpush.msra.mxu0 0.0
  %942 = vmatpush.msra.mxu0 0.0
  %943 = vmatpush.msra.mxu0 0.0
  %944 = vmatpush.msra.mxu0 0.0
  %945 = vmatpush.msra.mxu0 0.0
  %946 = vmatpush.msra.mxu0 0.0
  %947 = vmatpush.msra.mxu0 0.0
  %948 = vmatpush.msra.mxu0 %v398
  %949 = vmatpush.msra.mxu0 %v397
  %950 = vmatpush.msra.mxu0 %v396
  %951 = vmatpush.msra.mxu0 %v395
  %952 = vmatmul.f32.gmra.mxu0 %v854
  %v953 = vpop.f32.mrf.mxu0
  %v954 = vadd.f32 0.0, %v953
  %955 = vdwg.mxu0
  %v956 = vadd.f32 %v336, %v954
  %v957 = vtanh.pop %v956
  %958 = vmatpush.msra.mxu0 0.0
  %959 = vmatpush.msra.mxu0 0.0
  %960 = vmatpush.msra.mxu0 0.0
  %961 = vmatpush.msra.mxu0 0.0
  %962 = vmatpush.msra.mxu0 0.0
  %963 = vmatpush.msra.mxu0 0.0
  %964 = vmatpush.msra.mxu0 0.0
  %965 = vmatpush.msra.mxu0 0.0
  %966 = vmatpush.msra.mxu0 0.0
  %967 = vmatpush.msra.mxu0 0.0
  %968 = vmatpush.msra.mxu0 0.0
  %969 = vmatpush.msra.mxu0 0.0
  %970 = vmatpush.msra.mxu0 %v402
  %971 = vmatpush.msra.mxu0 %v401
  %972 = vmatpush.msra.mxu0 %v400
  %973 = vmatpush.msra.mxu0 %v399
  %974 = vmatmul.f32.gmra.mxu0 %v854
  %v975 = vpop.f32.mrf.mxu0
  %v976 = vadd.f32 0.0, %v975
  %977 = vdwg.mxu0
  %v978 = vadd.f32 %v380, %v976
  %v979 = vxor.u32 %v978, 2147483648
  %v980 = vmul.f32 %v979, 1.442695
  %v981 = vpow.pop %v980
  %v982 = vadd.f32 %v981, 1.0
  %v983 = vrcp.pop %v982
  %v984 = vmul.f32 %v982, %v983
  %v985 = vsub.f32 1.0, %v984
  %v986 = vmul.f32 %v983, %v985
  %v987 = vadd.f32 %v983, %v986
  %vm988 = vweird.f32 %v982
  %vm989 = vweird.f32 %v983
  %vm990 = vmor %vm988, %vm989
  %v991 = vsel %vm990, %v983, %v987
  %v992 = vand.u32 2147483647, %v982
  %vm993 = vcmp.eq.f32.partialorder %v992, 8.507059e+37
  %v994 = vand.u32 %v982, 2147483648
  %v995 = vor.u32 1.1754944e-38, %v994
  %v996 = vsel %vm993, %v995, %v991
  %v997 = vmul.f32 1.0, %v996
  %v998 = vmul.f32 %v935, %v850
  %v999 = vmul.f32 %v895, %v957
  %v1000 = vadd.f32 %v998, %v999
  %v1001 = vtanh.pop %v1000
  %v1002 = vmul.f32 %v997, %v1001
  %v1004 = vsel %vm133, %v1002, 0
  %1006 = vmatpush.msra.mxu0 0.0
  %1007 = vmatpush.msra.mxu0 0.0
  %1008 = vmatpush.msra.mxu0 0.0
  %1009 = vmatpush.msra.mxu0 0.0
  %1010 = vmatpush.msra.mxu0 0.0
  %1011 = vmatpush.msra.mxu0 0.0
  %1012 = vmatpush.msra.mxu0 0.0
  %1013 = vmatpush.msra.mxu0 0.0
  %1014 = vmatpush.msra.mxu0 0.0
  %1015 = vmatpush.msra.mxu0 0.0
  %1016 = vmatpush.msra.mxu0 0.0
  %1017 = vmatpush.msra.mxu0 0.0
  %1018 = vmatpush.msra.mxu0 %v390
  %1019 = vmatpush.msra.mxu0 %v389
  %1020 = vmatpush.msra.mxu0 %v388
  %1021 = vmatpush.msra.mxu0 %v387
  %1022 = vmatmul.f32.gmra.mxu0 %v1004
  %v1023 = vpop.f32.mrf.mxu0
  %v1024 = vadd.f32 0.0, %v1023
  %1025 = vdwg.mxu0
  %v1026 = vadd.f32 %v238, %v1024
  %v1027 = vxor.u32 %v1026, 2147483648
  %v1028 = vmul.f32 %v1027, 1.442695
  %v1029 = vpow.pop %v1028
  %v1030 = vadd.f32 %v1029, 1.0
  %v1031 = vrcp.pop %v1030
  %v1032 = vmul.f32 %v1030, %v1031
  %v1033 = vsub.f32 1.0, %v1032
  %v1034 = vmul.f32 %v1031, %v1033
  %v1035 = vadd.f32 %v1031, %v1034
  %vm1036 = vweird.f32 %v1030
  %vm1037 = vweird.f32 %v1031
  %vm1038 = vmor %vm1036, %vm1037
  %v1039 = vsel %vm1038, %v1031, %v1035
  %v1040 = vand.u32 2147483647, %v1030
  %vm1041 = vcmp.eq.f32.partialorder %v1040, 8.507059e+37
  %v1042 = vand.u32 %v1030, 2147483648
  %v1043 = vor.u32 1.1754944e-38, %v1042
  %v1044 = vsel %vm1041, %v1043, %v1039
  %v1045 = vmul.f32 1.0, %v1044
  %1046 = vmatpush.msra.mxu0 0.0
  %1047 = vmatpush.msra.mxu0 0.0
  %1048 = vmatpush.msra.mxu0 0.0
  %1049 = vmatpush.msra.mxu0 0.0
  %1050 = vmatpush.msra.mxu0 0.0
  %1051 = vmatpush.msra.mxu0 0.0
  %1052 = vmatpush.msra.mxu0 0.0
  %1053 = vmatpush.msra.mxu0 0.0
  %1054 = vmatpush.msra.mxu0 0.0
  %1055 = vmatpush.msra.mxu0 0.0
  %1056 = vmatpush.msra.mxu0 0.0
  %1057 = vmatpush.msra.mxu0 0.0
  %1058 = vmatpush.msra.mxu0 %v394
  %1059 = vmatpush.msra.mxu0 %v393
  %1060 = vmatpush.msra.mxu0 %v392
  %1061 = vmatpush.msra.mxu0 %v391
  %1062 = vmatmul.f32.gmra.mxu0 %v1004
  %v1063 = vpop.f32.mrf.mxu0
  %v1064 = vadd.f32 0.0, %v1063
  %1065 = vdwg.mxu0
  %v1066 = vadd.f32 %v282, %v1064
  %v1067 = vxor.u32 %v1066, 2147483648
  %v1068 = vmul.f32 %v1067, 1.442695
  %v1069 = vpow.pop %v1068
  %v1070 = vadd.f32 %v1069, 1.0
  %v1071 = vrcp.pop %v1070
  %v1072 = vmul.f32 %v1070, %v1071
  %v1073 = vsub.f32 1.0, %v1072
  %v1074 = vmul.f32 %v1071, %v1073
  %v1075 = vadd.f32 %v1071, %v1074
  %vm1076 = vweird.f32 %v1070
  %vm1077 = vweird.f32 %v1071
  %vm1078 = vmor %vm1076, %vm1077
  %v1079 = vsel %vm1078, %v1071, %v1075
  %v1080 = vand.u32 2147483647, %v1070
  %vm1081 = vcmp.eq.f32.partialorder %v1080, 8.507059e+37
  %v1082 = vand.u32 %v1070, 2147483648
  %v1083 = vor.u32 1.1754944e-38, %v1082
  %v1084 = vsel %vm1081, %v1083, %v1079
  %v1085 = vmul.f32 1.0, %v1084
  %1086 = vmatpush.msra.mxu0 0.0
  %1087 = vmatpush.msra.mxu0 0.0
  %1088 = vmatpush.msra.mxu0 0.0
  %1089 = vmatpush.msra.mxu0 0.0
  %1090 = vmatpush.msra.mxu0 0.0
  %1091 = vmatpush.msra.mxu0 0.0
  %1092 = vmatpush.msra.mxu0 0.0
  %1093 = vmatpush.msra.mxu0 0.0
  %1094 = vmatpush.msra.mxu0 0.0
  %1095 = vmatpush.msra.mxu0 0.0
  %1096 = vmatpush.msra.mxu0 0.0
  %1097 = vmatpush.msra.mxu0 0.0
  %1098 = vmatpush.msra.mxu0 %v398
  %1099 = vmatpush.msra.mxu0 %v397
  %1100 = vmatpush.msra.mxu0 %v396
  %1101 = vmatpush.msra.mxu0 %v395
  %1102 = vmatmul.f32.gmra.mxu0 %v1004
  %v1103 = vpop.f32.mrf.mxu0
  %v1104 = vadd.f32 0.0, %v1103
  %1105 = vdwg.mxu0
  %v1106 = vadd.f32 %v326, %v1104
  %v1107 = vtanh.pop %v1106
  %1108 = vmatpush.msra.mxu0 0.0
  %1109 = vmatpush.msra.mxu0 0.0
  %1110 = vmatpush.msra.mxu0 0.0
  %1111 = vmatpush.msra.mxu0 0.0
  %1112 = vmatpush.msra.mxu0 0.0
  %1113 = vmatpush.msra.mxu0 0.0
  %1114 = vmatpush.msra.mxu0 0.0
  %1115 = vmatpush.msra.mxu0 0.0
  %1116 = vmatpush.msra.mxu0 0.0
  %1117 = vmatpush.msra.mxu0 0.0
  %1118 = vmatpush.msra.mxu0 0.0
  %1119 = vmatpush.msra.mxu0 0.0
  %1120 = vmatpush.msra.mxu0 %v402
  %1121 = vmatpush.msra.mxu0 %v401
  %1122 = vmatpush.msra.mxu0 %v400
  %1123 = vmatpush.msra.mxu0 %v399
  %1124 = vmatmul.f32.gmra.mxu0 %v1004
  %v1125 = vpop.f32.mrf.mxu0
  %v1126 = vadd.f32 0.0, %v1125
  %1127 = vdwg.mxu0
  %v1128 = vadd.f32 %v370, %v1126
  %v1129 = vxor.u32 %v1128, 2147483648
  %v1130 = vmul.f32 %v1129, 1.442695
  %v1131 = vpow.pop %v1130
  %v1132 = vadd.f32 %v1131, 1.0
  %v1133 = vrcp.pop %v1132
  %v1134 = vmul.f32 %v1132, %v1133
  %v1135 = vsub.f32 1.0, %v1134
  %v1136 = vmul.f32 %v1133, %v1135
  %v1137 = vadd.f32 %v1133, %v1136
  %vm1138 = vweird.f32 %v1132
  %vm1139 = vweird.f32 %v1133
  %vm1140 = vmor %vm1138, %vm1139
  %v1141 = vsel %vm1140, %v1133, %v1137
  %v1142 = vand.u32 2147483647, %v1132
  %vm1143 = vcmp.eq.f32.partialorder %v1142, 8.507059e+37
  %v1144 = vand.u32 %v1132, 2147483648
  %v1145 = vor.u32 1.1754944e-38, %v1144
  %v1146 = vsel %vm1143, %v1145, %v1141
  %v1147 = vmul.f32 1.0, %v1146
  %v1148 = vmul.f32 %v1085, %v1000
  %v1149 = vmul.f32 %v1045, %v1107
  %v1150 = vadd.f32 %v1148, %v1149
  %v1151 = vtanh.pop %v1150
  %v1152 = vmul.f32 %v1147, %v1151
  %v1154 = vsel %vm133, %v1152, 0
  %1156 = vmatpush.msra.mxu0 0.0
  %1157 = vmatpush.msra.mxu0 0.0
  %1158 = vmatpush.msra.mxu0 0.0
  %1159 = vmatpush.msra.mxu0 0.0
  %1160 = vmatpush.msra.mxu0 0.0
  %1161 = vmatpush.msra.mxu0 0.0
  %1162 = vmatpush.msra.mxu0 0.0
  %1163 = vmatpush.msra.mxu0 0.0
  %1164 = vmatpush.msra.mxu0 0.0
  %1165 = vmatpush.msra.mxu0 0.0
  %1166 = vmatpush.msra.mxu0 0.0
  %1167 = vmatpush.msra.mxu0 0.0
  %1168 = vmatpush.msra.mxu0 %v390
  %1169 = vmatpush.msra.mxu0 %v389
  %1170 = vmatpush.msra.mxu0 %v388
  %1171 = vmatpush.msra.mxu0 %v387
  %1172 = vmatmul.f32.gmra.mxu0 %v1154
  %v1173 = vpop.f32.mrf.mxu0
  %v1174 = vadd.f32 0.0, %v1173
  %1175 = vdwg.mxu0
  %v1176 = vadd.f32 %v249, %v1174
  %v1177 = vxor.u32 %v1176, 2147483648
  %v1178 = vmul.f32 %v1177, 1.442695
  %v1179 = vpow.pop %v1178
  %v1180 = vadd.f32 %v1179, 1.0
  %v1181 = vrcp.pop %v1180
  %v1182 = vmul.f32 %v1180, %v1181
  %v1183 = vsub.f32 1.0, %v1182
  %v1184 = vmul.f32 %v1181, %v1183
  %v1185 = vadd.f32 %v1181, %v1184
  %vm1186 = vweird.f32 %v1180
  %vm1187 = vweird.f32 %v1181
  %vm1188 = vmor %vm1186, %vm1187
  %v1189 = vsel %vm1188, %v1181, %v1185
  %v1190 = vand.u32 2147483647, %v1180
  %vm1191 = vcmp.eq.f32.partialorder %v1190, 8.507059e+37
  %v1192 = vand.u32 %v1180, 2147483648
  %v1193 = vor.u32 1.1754944e-38, %v1192
  %v1194 = vsel %vm1191, %v1193, %v1189
  %v1195 = vmul.f32 1.0, %v1194
  %1196 = vmatpush.msra.mxu0 0.0
  %1197 = vmatpush.msra.mxu0 0.0
  %1198 = vmatpush.msra.mxu0 0.0
  %1199 = vmatpush.msra.mxu0 0.0
  %1200 = vmatpush.msra.mxu0 0.0
  %1201 = vmatpush.msra.mxu0 0.0
  %1202 = vmatpush.msra.mxu0 0.0
  %1203 = vmatpush.msra.mxu0 0.0
  %1204 = vmatpush.msra.mxu0 0.0
  %1205 = vmatpush.msra.mxu0 0.0
  %1206 = vmatpush.msra.mxu0 0.0
  %1207 = vmatpush.msra.mxu0 0.0
  %1208 = vmatpush.msra.mxu0 %v394
  %1209 = vmatpush.msra.mxu0 %v393
  %1210 = vmatpush.msra.mxu0 %v392
  %1211 = vmatpush.msra.mxu0 %v391
  %1212 = vmatmul.f32.gmra.mxu0 %v1154
  %v1213 = vpop.f32.mrf.mxu0
  %v1214 = vadd.f32 0.0, %v1213
  %1215 = vdwg.mxu0
  %v1216 = vadd.f32 %v293, %v1214
  %v1217 = vxor.u32 %v1216, 2147483648
  %v1218 = vmul.f32 %v1217, 1.442695
  %v1219 = vpow.pop %v1218
  %v1220 = vadd.f32 %v1219, 1.0
  %v1221 = vrcp.pop %v1220
  %v1222 = vmul.f32 %v1220, %v1221
  %v1223 = vsub.f32 1.0, %v1222
  %v1224 = vmul.f32 %v1221, %v1223
  %v1225 = vadd.f32 %v1221, %v1224
  %vm1226 = vweird.f32 %v1220
  %vm1227 = vweird.f32 %v1221
  %vm1228 = vmor %vm1226, %vm1227
  %v1229 = vsel %vm1228, %v1221, %v1225
  %v1230 = vand.u32 2147483647, %v1220
  %vm1231 = vcmp.eq.f32.partialorder %v1230, 8.507059e+37
  %v1232 = vand.u32 %v1220, 2147483648
  %v1233 = vor.u32 1.1754944e-38, %v1232
  %v1234 = vsel %vm1231, %v1233, %v1229
  %v1235 = vmul.f32 1.0, %v1234
  %1236 = vmatpush.msra.mxu0 0.0
  %1237 = vmatpush.msra.mxu0 0.0
  %1238 = vmatpush.msra.mxu0 0.0
  %1239 = vmatpush.msra.mxu0 0.0
  %1240 = vmatpush.msra.mxu0 0.0
  %1241 = vmatpush.msra.mxu0 0.0
  %1242 = vmatpush.msra.mxu0 0.0
  %1243 = vmatpush.msra.mxu0 0.0
  %1244 = vmatpush.msra.mxu0 0.0
  %1245 = vmatpush.msra.mxu0 0.0
  %1246 = vmatpush.msra.mxu0 0.0
  %1247 = vmatpush.msra.mxu0 0.0
  %1248 = vmatpush.msra.mxu0 %v398
  %1249 = vmatpush.msra.mxu0 %v397
  %1250 = vmatpush.msra.mxu0 %v396
  %1251 = vmatpush.msra.mxu0 %v395
  %1252 = vmatmul.f32.gmra.mxu0 %v1154
  %v1253 = vpop.f32.mrf.mxu0
  %v1254 = vadd.f32 0.0, %v1253
  %1255 = vdwg.mxu0
  %v1256 = vadd.f32 %v337, %v1254
  %v1257 = vtanh.pop %v1256
  %1258 = vmatpush.msra.mxu0 0.0
  %1259 = vmatpush.msra.mxu0 0.0
  %1260 = vmatpush.msra.mxu0 0.0
  %1261 = vmatpush.msra.mxu0 0.0
  %1262 = vmatpush.msra.mxu0 0.0
  %1263 = vmatpush.msra.mxu0 0.0
  %1264 = vmatpush.msra.mxu0 0.0
  %1265 = vmatpush.msra.mxu0 0.0
  %1266 = vmatpush.msra.mxu0 0.0
  %1267 = vmatpush.msra.mxu0 0.0
  %1268 = vmatpush.msra.mxu0 0.0
  %1269 = vmatpush.msra.mxu0 0.0
  %1270 = vmatpush.msra.mxu0 %v402
  %1271 = vmatpush.msra.mxu0 %v401
  %1272 = vmatpush.msra.mxu0 %v400
  %1273 = vmatpush.msra.mxu0 %v399
  %1274 = vmatmul.f32.gmra.mxu0 %v1154
  %v1275 = vpop.f32.mrf.mxu0
  %v1276 = vadd.f32 0.0, %v1275
  %1277 = vdwg.mxu0
  %v1278 = vadd.f32 %v381, %v1276
  %v1279 = vxor.u32 %v1278, 2147483648
  %v1280 = vmul.f32 %v1279, 1.442695
  %v1281 = vpow.pop %v1280
  %v1282 = vadd.f32 %v1281, 1.0
  %v1283 = vrcp.pop %v1282
  %v1284 = vmul.f32 %v1282, %v1283
  %v1285 = vsub.f32 1.0, %v1284
  %v1286 = vmul.f32 %v1283, %v1285
  %v1287 = vadd.f32 %v1283, %v1286
  %vm1288 = vweird.f32 %v1282
  %vm1289 = vweird.f32 %v1283
  %vm1290 = vmor %vm1288, %vm1289
  %v1291 = vsel %vm1290, %v1283, %v1287
  %v1292 = vand.u32 2147483647, %v1282
  %vm1293 = vcmp.eq.f32.partialorder %v1292, 8.507059e+37
  %v1294 = vand.u32 %v1282, 2147483648
  %v1295 = vor.u32 1.1754944e-38, %v1294
  %v1296 = vsel %vm1293, %v1295, %v1291
  %v1297 = vmul.f32 1.0, %v1296
  %v1298 = vmul.f32 %v1235, %v1150
  %v1299 = vmul.f32 %v1195, %v1257
  %v1300 = vadd.f32 %v1298, %v1299
  %v1301 = vtanh.pop %v1300
  %v1302 = vmul.f32 %v1297, %v1301
  %v1304 = vsel %vm133, %v1302, 0
  %1306 = vmatpush.msra.mxu0 0.0
  %1307 = vmatpush.msra.mxu0 0.0
  %1308 = vmatpush.msra.mxu0 0.0
  %1309 = vmatpush.msra.mxu0 0.0
  %1310 = vmatpush.msra.mxu0 0.0
  %1311 = vmatpush.msra.mxu0 0.0
  %1312 = vmatpush.msra.mxu0 0.0
  %1313 = vmatpush.msra.mxu0 0.0
  %1314 = vmatpush.msra.mxu0 0.0
  %1315 = vmatpush.msra.mxu0 0.0
  %1316 = vmatpush.msra.mxu0 0.0
  %1317 = vmatpush.msra.mxu0 0.0
  %1318 = vmatpush.msra.mxu0 %v390
  %1319 = vmatpush.msra.mxu0 %v389
  %1320 = vmatpush.msra.mxu0 %v388
  %1321 = vmatpush.msra.mxu0 %v387
  %1322 = vmatmul.f32.gmra.mxu0 %v1304
  %v1323 = vpop.f32.mrf.mxu0
  %v1324 = vadd.f32 0.0, %v1323
  %1325 = vdwg.mxu0
  %v1326 = vadd.f32 %v241, %v1324
  %v1327 = vxor.u32 %v1326, 2147483648
  %v1328 = vmul.f32 %v1327, 1.442695
  %v1329 = vpow.pop %v1328
  %v1330 = vadd.f32 %v1329, 1.0
  %v1331 = vrcp.pop %v1330
  %v1332 = vmul.f32 %v1330, %v1331
  %v1333 = vsub.f32 1.0, %v1332
  %v1334 = vmul.f32 %v1331, %v1333
  %v1335 = vadd.f32 %v1331, %v1334
  %vm1336 = vweird.f32 %v1330
  %vm1337 = vweird.f32 %v1331
  %vm1338 = vmor %vm1336, %vm1337
  %v1339 = vsel %vm1338, %v1331, %v1335
  %v1340 = vand.u32 2147483647, %v1330
  %vm1341 = vcmp.eq.f32.partialorder %v1340, 8.507059e+37
  %v1342 = vand.u32 %v1330, 2147483648
  %v1343 = vor.u32 1.1754944e-38, %v1342
  %v1344 = vsel %vm1341, %v1343, %v1339
  %v1345 = vmul.f32 1.0, %v1344
  %1346 = vmatpush.msra.mxu0 0.0
  %1347 = vmatpush.msra.mxu0 0.0
  %1348 = vmatpush.msra.mxu0 0.0
  %1349 = vmatpush.msra.mxu0 0.0
  %1350 = vmatpush.msra.mxu0 0.0
  %1351 = vmatpush.msra.mxu0 0.0
  %1352 = vmatpush.msra.mxu0 0.0
  %1353 = vmatpush.msra.mxu0 0.0
  %1354 = vmatpush.msra.mxu0 0.0
  %1355 = vmatpush.msra.mxu0 0.0
  %1356 = vmatpush.msra.mxu0 0.0
  %1357 = vmatpush.msra.mxu0 0.0
  %1358 = vmatpush.msra.mxu0 %v394
  %1359 = vmatpush.msra.mxu0 %v393
  %1360 = vmatpush.msra.mxu0 %v392
  %1361 = vmatpush.msra.mxu0 %v391
  %1362 = vmatmul.f32.gmra.mxu0 %v1304
  %v1363 = vpop.f32.mrf.mxu0
  %v1364 = vadd.f32 0.0, %v1363
  %1365 = vdwg.mxu0
  %v1366 = vadd.f32 %v285, %v1364
  %v1367 = vxor.u32 %v1366, 2147483648
  %v1368 = vmul.f32 %v1367, 1.442695
  %v1369 = vpow.pop %v1368
  %v1370 = vadd.f32 %v1369, 1.0
  %v1371 = vrcp.pop %v1370
  %v1372 = vmul.f32 %v1370, %v1371
  %v1373 = vsub.f32 1.0, %v1372
  %v1374 = vmul.f32 %v1371, %v1373
  %v1375 = vadd.f32 %v1371, %v1374
  %vm1376 = vweird.f32 %v1370
  %vm1377 = vweird.f32 %v1371
  %vm1378 = vmor %vm1376, %vm1377
  %v1379 = vsel %vm1378, %v1371, %v1375
  %v1380 = vand.u32 2147483647, %v1370
  %vm1381 = vcmp.eq.f32.partialorder %v1380, 8.507059e+37
  %v1382 = vand.u32 %v1370, 2147483648
  %v1383 = vor.u32 1.1754944e-38, %v1382
  %v1384 = vsel %vm1381, %v1383, %v1379
  %v1385 = vmul.f32 1.0, %v1384
  %1386 = vmatpush.msra.mxu0 0.0
  %1387 = vmatpush.msra.mxu0 0.0
  %1388 = vmatpush.msra.mxu0 0.0
  %1389 = vmatpush.msra.mxu0 0.0
  %1390 = vmatpush.msra.mxu0 0.0
  %1391 = vmatpush.msra.mxu0 0.0
  %1392 = vmatpush.msra.mxu0 0.0
  %1393 = vmatpush.msra.mxu0 0.0
  %1394 = vmatpush.msra.mxu0 0.0
  %1395 = vmatpush.msra.mxu0 0.0
  %1396 = vmatpush.msra.mxu0 0.0
  %1397 = vmatpush.msra.mxu0 0.0
  %1398 = vmatpush.msra.mxu0 %v398
  %1399 = vmatpush.msra.mxu0 %v397
  %1400 = vmatpush.msra.mxu0 %v396
  %1401 = vmatpush.msra.mxu0 %v395
  %1402 = vmatmul.f32.gmra.mxu0 %v1304
  %v1403 = vpop.f32.mrf.mxu0
  %v1404 = vadd.f32 0.0, %v1403
  %1405 = vdwg.mxu0
  %v1406 = vadd.f32 %v329, %v1404
  %v1407 = vtanh.pop %v1406
  %1408 = vmatpush.msra.mxu0 0.0
  %1409 = vmatpush.msra.mxu0 0.0
  %1410 = vmatpush.msra.mxu0 0.0
  %1411 = vmatpush.msra.mxu0 0.0
  %1412 = vmatpush.msra.mxu0 0.0
  %1413 = vmatpush.msra.mxu0 0.0
  %1414 = vmatpush.msra.mxu0 0.0
  %1415 = vmatpush.msra.mxu0 0.0
  %1416 = vmatpush.msra.mxu0 0.0
  %1417 = vmatpush.msra.mxu0 0.0
  %1418 = vmatpush.msra.mxu0 0.0
  %1419 = vmatpush.msra.mxu0 0.0
  %1420 = vmatpush.msra.mxu0 %v402
  %1421 = vmatpush.msra.mxu0 %v401
  %1422 = vmatpush.msra.mxu0 %v400
  %1423 = vmatpush.msra.mxu0 %v399
  %1424 = vmatmul.f32.gmra.mxu0 %v1304
  %v1425 = vpop.f32.mrf.mxu0
  %v1426 = vadd.f32 0.0, %v1425
  %1427 = vdwg.mxu0
  %v1428 = vadd.f32 %v373, %v1426
  %v1429 = vxor.u32 %v1428, 2147483648
  %v1430 = vmul.f32 %v1429, 1.442695
  %v1431 = vpow.pop %v1430
  %v1432 = vadd.f32 %v1431, 1.0
  %v1433 = vrcp.pop %v1432
  %v1434 = vmul.f32 %v1432, %v1433
  %v1435 = vsub.f32 1.0, %v1434
  %v1436 = vmul.f32 %v1433, %v1435
  %v1437 = vadd.f32 %v1433, %v1436
  %vm1438 = vweird.f32 %v1432
  %vm1439 = vweird.f32 %v1433
  %vm1440 = vmor %vm1438, %vm1439
  %v1441 = vsel %vm1440, %v1433, %v1437
  %v1442 = vand.u32 2147483647, %v1432
  %vm1443 = vcmp.eq.f32.partialorder %v1442, 8.507059e+37
  %v1444 = vand.u32 %v1432, 2147483648
  %v1445 = vor.u32 1.1754944e-38, %v1444
  %v1446 = vsel %vm1443, %v1445, %v1441
  %v1447 = vmul.f32 1.0, %v1446
  %v1448 = vmul.f32 %v1385, %v1300
  %v1449 = vmul.f32 %v1345, %v1407
  %v1450 = vadd.f32 %v1448, %v1449
  %v1451 = vtanh.pop %v1450
  %v1452 = vmul.f32 %v1447, %v1451
  %v1454 = vsel %vm133, %v1452, 0
  %1456 = vmatpush.msra.mxu0 0.0
  %1457 = vmatpush.msra.mxu0 0.0
  %1458 = vmatpush.msra.mxu0 0.0
  %1459 = vmatpush.msra.mxu0 0.0
  %1460 = vmatpush.msra.mxu0 0.0
  %1461 = vmatpush.msra.mxu0 0.0
  %1462 = vmatpush.msra.mxu0 0.0
  %1463 = vmatpush.msra.mxu0 0.0
  %1464 = vmatpush.msra.mxu0 0.0
  %1465 = vmatpush.msra.mxu0 0.0
  %1466 = vmatpush.msra.mxu0 0.0
  %1467 = vmatpush.msra.mxu0 0.0
  %1468 = vmatpush.msra.mxu0 %v390
  %1469 = vmatpush.msra.mxu0 %v389
  %1470 = vmatpush.msra.mxu0 %v388
  %1471 = vmatpush.msra.mxu0 %v387
  %1472 = vmatmul.f32.gmra.mxu0 %v1454
  %v1473 = vpop.f32.mrf.mxu0
  %v1474 = vadd.f32 0.0, %v1473
  %1475 = vdwg.mxu0
  %v1476 = vadd.f32 %v250, %v1474
  %v1477 = vxor.u32 %v1476, 2147483648
  %v1478 = vmul.f32 %v1477, 1.442695
  %v1479 = vpow.pop %v1478
  %v1480 = vadd.f32 %v1479, 1.0
  %v1481 = vrcp.pop %v1480
  %v1482 = vmul.f32 %v1480, %v1481
  %v1483 = vsub.f32 1.0, %v1482
  %v1484 = vmul.f32 %v1481, %v1483
  %v1485 = vadd.f32 %v1481, %v1484
  %vm1486 = vweird.f32 %v1480
  %vm1487 = vweird.f32 %v1481
  %vm1488 = vmor %vm1486, %vm1487
  %v1489 = vsel %vm1488, %v1481, %v1485
  %v1490 = vand.u32 2147483647, %v1480
  %vm1491 = vcmp.eq.f32.partialorder %v1490, 8.507059e+37
  %v1492 = vand.u32 %v1480, 2147483648
  %v1493 = vor.u32 1.1754944e-38, %v1492
  %v1494 = vsel %vm1491, %v1493, %v1489
  %v1495 = vmul.f32 1.0, %v1494
  %1496 = vmatpush.msra.mxu0 0.0
  %1497 = vmatpush.msra.mxu0 0.0
  %1498 = vmatpush.msra.mxu0 0.0
  %1499 = vmatpush.msra.mxu0 0.0
  %1500 = vmatpush.msra.mxu0 0.0
  %1501 = vmatpush.msra.mxu0 0.0
  %1502 = vmatpush.msra.mxu0 0.0
  %1503 = vmatpush.msra.mxu0 0.0
  %1504 = vmatpush.msra.mxu0 0.0
  %1505 = vmatpush.msra.mxu0 0.0
  %1506 = vmatpush.msra.mxu0 0.0
  %1507 = vmatpush.msra.mxu0 0.0
  %1508 = vmatpush.msra.mxu0 %v394
  %1509 = vmatpush.msra.mxu0 %v393
  %1510 = vmatpush.msra.mxu0 %v392
  %1511 = vmatpush.msra.mxu0 %v391
  %1512 = vmatmul.f32.gmra.mxu0 %v1454
  %v1513 = vpop.f32.mrf.mxu0
  %v1514 = vadd.f32 0.0, %v1513
  %1515 = vdwg.mxu0
  %v1516 = vadd.f32 %v294, %v1514
  %v1517 = vxor.u32 %v1516, 2147483648
  %v1518 = vmul.f32 %v1517, 1.442695
  %v1519 = vpow.pop %v1518
  %v1520 = vadd.f32 %v1519, 1.0
  %v1521 = vrcp.pop %v1520
  %v1522 = vmul.f32 %v1520, %v1521
  %v1523 = vsub.f32 1.0, %v1522
  %v1524 = vmul.f32 %v1521, %v1523
  %v1525 = vadd.f32 %v1521, %v1524
  %vm1526 = vweird.f32 %v1520
  %vm1527 = vweird.f32 %v1521
  %vm1528 = vmor %vm1526, %vm1527
  %v1529 = vsel %vm1528, %v1521, %v1525
  %v1530 = vand.u32 2147483647, %v1520
  %vm1531 = vcmp.eq.f32.partialorder %v1530, 8.507059e+37
  %v1532 = vand.u32 %v1520, 2147483648
  %v1533 = vor.u32 1.1754944e-38, %v1532
  %v1534 = vsel %vm1531, %v1533, %v1529
  %v1535 = vmul.f32 1.0, %v1534
  %1536 = vmatpush.msra.mxu0 0.0
  %1537 = vmatpush.msra.mxu0 0.0
  %1538 = vmatpush.msra.mxu0 0.0
  %1539 = vmatpush.msra.mxu0 0.0
  %1540 = vmatpush.msra.mxu0 0.0
  %1541 = vmatpush.msra.mxu0 0.0
  %1542 = vmatpush.msra.mxu0 0.0
  %1543 = vmatpush.msra.mxu0 0.0
  %1544 = vmatpush.msra.mxu0 0.0
  %1545 = vmatpush.msra.mxu0 0.0
  %1546 = vmatpush.msra.mxu0 0.0
  %1547 = vmatpush.msra.mxu0 0.0
  %1548 = vmatpush.msra.mxu0 %v398
  %1549 = vmatpush.msra.mxu0 %v397
  %1550 = vmatpush.msra.mxu0 %v396
  %1551 = vmatpush.msra.mxu0 %v395
  %1552 = vmatmul.f32.gmra.mxu0 %v1454
  %v1553 = vpop.f32.mrf.mxu0
  %v1554 = vadd.f32 0.0, %v1553
  %1555 = vdwg.mxu0
  %v1556 = vadd.f32 %v338, %v1554
  %v1557 = vtanh.pop %v1556
  %1558 = vmatpush.msra.mxu0 0.0
  %1559 = vmatpush.msra.mxu0 0.0
  %1560 = vmatpush.msra.mxu0 0.0
  %1561 = vmatpush.msra.mxu0 0.0
  %1562 = vmatpush.msra.mxu0 0.0
  %1563 = vmatpush.msra.mxu0 0.0
  %1564 = vmatpush.msra.mxu0 0.0
  %1565 = vmatpush.msra.mxu0 0.0
  %1566 = vmatpush.msra.mxu0 0.0
  %1567 = vmatpush.msra.mxu0 0.0
  %1568 = vmatpush.msra.mxu0 0.0
  %1569 = vmatpush.msra.mxu0 0.0
  %1570 = vmatpush.msra.mxu0 %v402
  %1571 = vmatpush.msra.mxu0 %v401
  %1572 = vmatpush.msra.mxu0 %v400
  %1573 = vmatpush.msra.mxu0 %v399
  %1574 = vmatmul.f32.gmra.mxu0 %v1454
  %v1575 = vpop.f32.mrf.mxu0
  %v1576 = vadd.f32 0.0, %v1575
  %1577 = vdwg.mxu0
  %v1578 = vadd.f32 %v382, %v1576
  %v1579 = vxor.u32 %v1578, 2147483648
  %v1580 = vmul.f32 %v1579, 1.442695
  %v1581 = vpow.pop %v1580
  %v1582 = vadd.f32 %v1581, 1.0
  %v1583 = vrcp.pop %v1582
  %v1584 = vmul.f32 %v1582, %v1583
  %v1585 = vsub.f32 1.0, %v1584
  %v1586 = vmul.f32 %v1583, %v1585
  %v1587 = vadd.f32 %v1583, %v1586
  %vm1588 = vweird.f32 %v1582
  %vm1589 = vweird.f32 %v1583
  %vm1590 = vmor %vm1588, %vm1589
  %v1591 = vsel %vm1590, %v1583, %v1587
  %v1592 = vand.u32 2147483647, %v1582
  %vm1593 = vcmp.eq.f32.partialorder %v1592, 8.507059e+37
  %v1594 = vand.u32 %v1582, 2147483648
  %v1595 = vor.u32 1.1754944e-38, %v1594
  %v1596 = vsel %vm1593, %v1595, %v1591
  %v1597 = vmul.f32 1.0, %v1596
  %v1598 = vmul.f32 %v1535, %v1450
  %v1599 = vmul.f32 %v1495, %v1557
  %v1600 = vadd.f32 %v1598, %v1599
  %v1601 = vtanh.pop %v1600
  %v1602 = vmul.f32 %v1597, %v1601
  %v1603 = vld [vmem:[%s7] sm:$0xff]
  %v1604 = vld [vmem:[%s7 + $0x8] sm:$0xff]
  %v1605 = vld [vmem:[%s7 + $0x10] sm:$0xff]
  %v1606 = vld [vmem:[%s7 + $0x18] sm:$0xff]
  %1608 = vst [vmem:[#allocation1] ss:$2 sm:$0xff] %v552
  %s1609 = scalar_lea.vmem [#allocation1], 1
  %1610 = vst [vmem:[%s1609] ss:$2 sm:$0xff] %v702
  %s1611 = scalar_lea.vmem [#allocation1], 16
  %1612 = vst [vmem:[%s1611] ss:$2 sm:$0xff] %v852
  %s1613 = scalar_lea.vmem [#allocation1], 17
  %1614 = vst [vmem:[%s1613] ss:$2 sm:$0xff] %v1002
  %s1615 = scalar_lea.vmem [#allocation1], 32
  %1616 = vst [vmem:[%s1615] ss:$2 sm:$0xff] %v1152
  %s1617 = scalar_lea.vmem [#allocation1], 33
  %1618 = vst [vmem:[%s1617] ss:$2 sm:$0xff] %v1302
  %s1619 = scalar_lea.vmem [#allocation1], 48
  %1620 = vst [vmem:[%s1619] ss:$2 sm:$0xff] %v1452
  %s1621 = scalar_lea.vmem [#allocation1], 49
  %1622 = vst [vmem:[%s1621] ss:$2 sm:$0xff] %v1602
  %v1623 = vld.sshfl [vmem:[#allocation1] sm:$0xff pattern:$0x75316420]
  %v1624 = vld.sshfl [vmem:[#allocation1 + $0x10] sm:$0xff pattern:$0x75316420]
  %v1625 = vld.sshfl [vmem:[#allocation1 + $0x20] sm:$0xff pattern:$0x75316420]
  %v1626 = vld.sshfl [vmem:[#allocation1 + $0x30] sm:$0xff pattern:$0x75316420]
  %v1627 = vsel %vm133, %v1623, 0
  %v1629 = vsel %vm133, %v1624, 0
  %v1631 = vsel %vm133, %v1625, 0
  %v1633 = vsel %vm133, %v1626, 0
  %1635 = vmatpush.msra.mxu0 0.0
  %1636 = vmatpush.msra.mxu0 0.0
  %1637 = vmatpush.msra.mxu0 0.0
  %1638 = vmatpush.msra.mxu0 0.0
  %1639 = vmatpush.msra.mxu0 0.0
  %1640 = vmatpush.msra.mxu0 0.0
  %1641 = vmatpush.msra.mxu0 0.0
  %1642 = vmatpush.msra.mxu0 0.0
  %1643 = vmatpush.msra.mxu0 0.0
  %1644 = vmatpush.msra.mxu0 0.0
  %1645 = vmatpush.msra.mxu0 0.0
  %1646 = vmatpush.msra.mxu0 0.0
  %1647 = vmatpush.msra.mxu0 %v1606
  %1648 = vmatpush.msra.mxu0 %v1605
  %1649 = vmatpush.msra.mxu0 %v1604
  %1650 = vmatpush.msra.mxu0 %v1603
  %1651 = vmatmul.f32.gmra.mxu0 %v1627
  %v1652 = vpop.f32.mrf.mxu0
  %v1653 = vadd.f32 0.0, %v1652
  %1654 = vmatmul.f32.gmra.mxu0 %v1629
  %v1655 = vpop.f32.mrf.mxu0
  %v1656 = vadd.f32 0.0, %v1655
  %1657 = vmatmul.f32.gmra.mxu0 %v1631
  %v1658 = vpop.f32.mrf.mxu0
  %v1659 = vadd.f32 0.0, %v1658
  %1660 = vmatmul.f32.gmra.mxu0 %v1633
  %v1661 = vpop.f32.mrf.mxu0
  %v1662 = vadd.f32 0.0, %v1661
  %1663 = vdwg.mxu0
  %v1664 = vtanh.pop %v1653
  %v1665 = vtanh.pop %v1656
  %v1666 = vtanh.pop %v1659
  %v1667 = vtanh.pop %v1662
  %v1668 = vld [vmem:[%s8] sm:$0x1]
  %v1670 = vperm.slane %v1668, 0
  %v1672 = vmul.f32 %v1664, %v1670
  %v1673 = vmul.f32 %v1665, %v1670
  %v1674 = vmul.f32 %v1666, %v1670
  %v1675 = vmul.f32 %v1667, %v1670
  %vm1676 = vcmask 130048
  %v1677 = vsel %vm1676, %v1672, 0.0
  %1678 = vadd.xlane.f32.xlu0 %v1677
  %v1679 = vpop.xlane.xlu0 %1678
  %v1680 = vsel %vm1676, %v1673, 0.0
  %1681 = vadd.xlane.f32.xlu0 %v1680
  %v1682 = vpop.xlane.xlu0 %1681
  %v1683 = vsel %vm1676, %v1674, 0.0
  %1684 = vadd.xlane.f32.xlu0 %v1683
  %v1685 = vpop.xlane.xlu0 %1684
  %v1686 = vsel %vm1676, %v1675, 0.0
  %1687 = vadd.xlane.f32.xlu0 %v1686
  %v1688 = vpop.xlane.xlu0 %1687
  %v1694 = vunpack.c.l.s4 839922192
  %v1695 = vunpack.c.0.s8 %v1694
  %v1696 = vperm.slane %v1679, %v1695
  %v1698 = vunpack.c.l.s4 1985246804
  %v1699 = vunpack.c.0.s8 %v1698
  %v1700 = vperm.slane %v1679, %v1699
  %v1702 = vunpack.c.l.s4 839922192
  %v1703 = vunpack.c.0.s8 %v1702
  %v1704 = vperm.slane %v1682, %v1703
  %v1706 = vunpack.c.l.s4 1985246804
  %v1707 = vunpack.c.0.s8 %v1706
  %v1708 = vperm.slane %v1682, %v1707
  %v1710 = vunpack.c.l.s4 839922192
  %v1711 = vunpack.c.0.s8 %v1710
  %v1712 = vperm.slane %v1685, %v1711
  %v1714 = vunpack.c.l.s4 1985246804
  %v1715 = vunpack.c.0.s8 %v1714
  %v1716 = vperm.slane %v1685, %v1715
  %v1718 = vunpack.c.l.s4 839922192
  %v1719 = vunpack.c.0.s8 %v1718
  %v1720 = vperm.slane %v1688, %v1719
  %v1722 = vunpack.c.l.s4 1985246804
  %v1723 = vunpack.c.0.s8 %v1722
  %v1724 = vperm.slane %v1688, %v1723
  %v1733 = vmax.f32 %v1696, %v1712
  %v1734 = vmax.f32 %v1700, %v1716
  %v1735 = vmax.f32 %v1704, %v1720
  %v1736 = vmax.f32 %v1708, %v1724
  %v1737 = vmax.f32 %v1733, %v1734
  %v1738 = vmax.f32 %v1735, %v1736
  %v1739 = vmax.f32 %v1737, %v1738
  %v1740 = vsub.f32 %v1696, %v1739
  %v1741 = vsub.f32 %v1700, %v1739
  %v1742 = vsub.f32 %v1704, %v1739
  %v1743 = vsub.f32 %v1708, %v1739
  %v1744 = vsub.f32 %v1712, %v1739
  %v1745 = vsub.f32 %v1716, %v1739
  %v1746 = vsub.f32 %v1720, %v1739
  %v1747 = vsub.f32 %v1724, %v1739
  %v1748 = vmul.f32 %v1740, 1.442695
  %v1749 = vpow.pop %v1748
  %v1750 = vmul.f32 %v1741, 1.442695
  %v1751 = vpow.pop %v1750
  %v1752 = vmul.f32 %v1742, 1.442695
  %v1753 = vpow.pop %v1752
  %v1754 = vmul.f32 %v1743, 1.442695
  %v1755 = vpow.pop %v1754
  %v1756 = vmul.f32 %v1744, 1.442695
  %v1757 = vpow.pop %v1756
  %v1758 = vmul.f32 %v1745, 1.442695
  %v1759 = vpow.pop %v1758
  %v1760 = vmul.f32 %v1746, 1.442695
  %v1761 = vpow.pop %v1760
  %v1762 = vmul.f32 %v1747, 1.442695
  %v1763 = vpow.pop %v1762
  %vm1764 = vcmask 1043456
  %v1765 = vsel %vm1764, %v1749, 0.0
  %v1766 = vsel %vm1764, %v1751, 0.0
  %v1767 = vadd.f32 %v1765, %v1766
  %v1768 = vsel %vm1764, %v1753, 0.0
  %v1769 = vadd.f32 %v1767, %v1768
  %v1770 = vsel %vm1764, %v1755, 0.0
  %v1771 = vadd.f32 %v1769, %v1770
  %v1772 = vsel %vm1764, %v1757, 0.0
  %v1773 = vadd.f32 %v1771, %v1772
  %v1774 = vsel %vm1764, %v1759, 0.0
  %v1775 = vadd.f32 %v1773, %v1774
  %v1776 = vsel %vm1764, %v1761, 0.0
  %v1777 = vadd.f32 %v1775, %v1776
  %v1778 = vsel %vm1764, %v1763, 0.0
  %v1779 = vadd.f32 %v1777, %v1778
  %v1780 = vrcp.pop %v1779
  %v1781 = vmul.f32 %v1749, %v1780
  %v1782 = vmul.f32 %v1751, %v1780
  %v1783 = vmul.f32 %v1753, %v1780
  %v1784 = vmul.f32 %v1755, %v1780
  %v1785 = vmul.f32 %v1757, %v1780
  %v1786 = vmul.f32 %v1759, %v1780
  %v1787 = vmul.f32 %v1761, %v1780
  %v1788 = vmul.f32 %v1763, %v1780
  %1790 = vset.pattern.permute.xlu0 0
  %1791 = vperm.xlu0 %1790, %v1781
  %v1792 = vpop.permute.xlu0 %1791
  %v1795 = vunpack.c.l.s4 839922192
  %v1796 = vunpack.c.0.s8 %v1795
  %v1797 = vperm.slane %v1792, %v1796
  %1799 = vset.pattern.permute.xlu0 0
  %1800 = vperm.xlu0 %1799, %v1782
  %v1801 = vpop.permute.xlu0 %1800
  %v1804 = vunpack.c.l.s4 839922192
  %v1805 = vunpack.c.0.s8 %v1804
  %v1806 = vperm.slane %v1801, %v1805
  %1808 = vset.pattern.permute.xlu0 0
  %1809 = vperm.xlu0 %1808, %v1783
  %v1810 = vpop.permute.xlu0 %1809
  %v1813 = vunpack.c.l.s4 839922192
  %v1814 = vunpack.c.0.s8 %v1813
  %v1815 = vperm.slane %v1810, %v1814
  %1817 = vset.pattern.permute.xlu0 0
  %1818 = vperm.xlu0 %1817, %v1784
  %v1819 = vpop.permute.xlu0 %1818
  %v1822 = vunpack.c.l.s4 839922192
  %v1823 = vunpack.c.0.s8 %v1822
  %v1824 = vperm.slane %v1819, %v1823
  %1826 = vset.pattern.permute.xlu0 0
  %1827 = vperm.xlu0 %1826, %v1785
  %v1828 = vpop.permute.xlu0 %1827
  %v1831 = vunpack.c.l.s4 839922192
  %v1832 = vunpack.c.0.s8 %v1831
  %v1833 = vperm.slane %v1828, %v1832
  %1835 = vset.pattern.permute.xlu0 0
  %1836 = vperm.xlu0 %1835, %v1786
  %v1837 = vpop.permute.xlu0 %1836
  %v1840 = vunpack.c.l.s4 839922192
  %v1841 = vunpack.c.0.s8 %v1840
  %v1842 = vperm.slane %v1837, %v1841
  %1844 = vset.pattern.permute.xlu0 0
  %1845 = vperm.xlu0 %1844, %v1787
  %v1846 = vpop.permute.xlu0 %1845
  %v1849 = vunpack.c.l.s4 839922192
  %v1850 = vunpack.c.0.s8 %v1849
  %v1851 = vperm.slane %v1846, %v1850
  %1853 = vset.pattern.permute.xlu0 0
  %1854 = vperm.xlu0 %1853, %v1788
  %v1855 = vpop.permute.xlu0 %1854
  %v1858 = vunpack.c.l.s4 839922192
  %v1859 = vunpack.c.0.s8 %v1858
  %v1860 = vperm.slane %v1855, %v1859
  %v1861 = vmul.f32 %v552, %v1797
  %v1862 = vmul.f32 %v702, %v1806
  %v1863 = vmul.f32 %v852, %v1815
  %v1864 = vmul.f32 %v1002, %v1824
  %v1865 = vmul.f32 %v1152, %v1833
  %v1866 = vmul.f32 %v1302, %v1842
  %v1867 = vmul.f32 %v1452, %v1851
  %v1868 = vmul.f32 %v1602, %v1860
  %vm1869 = vcmask 257024
  %v1870 = vsel %vm1869, %v1861, 0.0
  %v1871 = vsel %vm1869, %v1862, 0.0
  %v1872 = vadd.f32 %v1870, %v1871
  %v1873 = vsel %vm1869, %v1863, 0.0
  %v1874 = vadd.f32 %v1872, %v1873
  %v1875 = vsel %vm1869, %v1864, 0.0
  %v1876 = vadd.f32 %v1874, %v1875
  %v1877 = vsel %vm1869, %v1865, 0.0
  %v1878 = vadd.f32 %v1876, %v1877
  %v1879 = vsel %vm1869, %v1866, 0.0
  %v1880 = vadd.f32 %v1878, %v1879
  %v1881 = vsel %vm1869, %v1867, 0.0
  %v1882 = vadd.f32 %v1880, %v1881
  %v1883 = vsel %vm1869, %v1868, 0.0
  %v1884 = vadd.f32 %v1882, %v1883
  %v1886 = vrot.slane %v1884, 2
  %v1888 = vsub.f32 %v1884, %v1886
  %v1889 = vand.u32 2147483647, %v1888
  %v1890 = vmul.f32 %v1884, %v1886
  %1891 = vrot.lane.b32.xlu0 %v1886, 32
  %v1892 = vpop.permute.xlu0 %1891
  %1895 = vrot.lane.b32.xlu0 %v1889, 64
  %v1896 = vpop.permute.xlu0 %1895
  %1899 = vrot.lane.b32.xlu0 %v1890, 96
  %v1900 = vpop.permute.xlu0 %1899
  %v1902 = vsel %vm133, %v1884, %v1892
  %vm1903 = vcmask 523264
  %v1904 = vsel %vm1903, %v1902, %v1896
  %vm1905 = vcmask 785408
  %v1906 = vsel %vm1905, %v1904, %v1900
  %v1907 = vld [vmem:[%s9] sm:$0xff]
  %v1908 = vld [vmem:[%s9 + $0x8] sm:$0xff]
  %v1909 = vld [vmem:[%s9 + $0x10] sm:$0xff]
  %v1910 = vld [vmem:[%s9 + $0x18] sm:$0xff]
  %v1911 = vld [vmem:[%s9 + $0x20] sm:$0xff]
  %v1912 = vld [vmem:[%s9 + $0x28] sm:$0xff]
  %v1913 = vld [vmem:[%s9 + $0x30] sm:$0xff]
  %v1914 = vld [vmem:[%s9 + $0x38] sm:$0xff]
  %v1915 = vld [vmem:[%s9 + $0x40] sm:$0xff]
  %v1916 = vld [vmem:[%s9 + $0x48] sm:$0xff]
  %v1917 = vld [vmem:[%s9 + $0x50] sm:$0xff]
  %v1918 = vld [vmem:[%s9 + $0x58] sm:$0xff]
  %v1919 = vld [vmem:[%s9 + $0x60] sm:$0xff]
  %v1920 = vld [vmem:[%s9 + $0x68] sm:$0xff]
  %v1921 = vld [vmem:[%s9 + $0x70] sm:$0xff]
  %v1922 = vld [vmem:[%s9 + $0x78] sm:$0xff]
  %v1923 = vld [vmem:[%s10] sm:$0x1]
  %v1925 = vperm.slane %v1923, 0
  %1927 = vmatpush.msra.mxu0 %v1922
  %1928 = vmatpush.msra.mxu0 %v1921
  %1929 = vmatpush.msra.mxu0 %v1920
  %1930 = vmatpush.msra.mxu0 %v1919
  %1931 = vmatpush.msra.mxu0 %v1918
  %1932 = vmatpush.msra.mxu0 %v1917
  %1933 = vmatpush.msra.mxu0 %v1916
  %1934 = vmatpush.msra.mxu0 %v1915
  %1935 = vmatpush.msra.mxu0 %v1914
  %1936 = vmatpush.msra.mxu0 %v1913
  %1937 = vmatpush.msra.mxu0 %v1912
  %1938 = vmatpush.msra.mxu0 %v1911
  %1939 = vmatpush.msra.mxu0 %v1910
  %1940 = vmatpush.msra.mxu0 %v1909
  %1941 = vmatpush.msra.mxu0 %v1908
  %1942 = vmatpush.msra.mxu0 %v1907
  %1943 = vmatmul.f32.gmra.mxu0 %v1906
  %v1944 = vpop.f32.mrf.mxu0
  %v1945 = vadd.f32 %v1925, %v1944
  %1946 = vdwg.mxu0
  %v1947 = vld [vmem:[%s11] sm:$0xff]
  %v1948 = vld [vmem:[%s11 + $0x8] sm:$0xff]
  %v1949 = vld [vmem:[%s11 + $0x10] sm:$0xff]
  %v1950 = vld [vmem:[%s11 + $0x18] sm:$0xff]
  %v1951 = vld [vmem:[%s11 + $0x20] sm:$0xff]
  %v1952 = vld [vmem:[%s11 + $0x28] sm:$0xff]
  %v1953 = vld [vmem:[%s11 + $0x30] sm:$0xff]
  %v1954 = vld [vmem:[%s11 + $0x38] sm:$0xff]
  %v1955 = vld [vmem:[%s12] sm:$0x1]
  %v1956 = vld [vmem:[%s12 + $0x1] sm:$0x1]
  %v1958 = vperm.slane %v1955, 0
  %v1961 = vsel %vm133, %v1945, 0
  %1963 = vmatpush.msra.mxu0 0.0
  %1964 = vmatpush.msra.mxu0 0.0
  %1965 = vmatpush.msra.mxu0 0.0
  %1966 = vmatpush.msra.mxu0 0.0
  %1967 = vmatpush.msra.mxu0 0.0
  %1968 = vmatpush.msra.mxu0 0.0
  %1969 = vmatpush.msra.mxu0 0.0
  %1970 = vmatpush.msra.mxu0 0.0
  %1971 = vmatpush.msra.mxu0 0.0
  %1972 = vmatpush.msra.mxu0 0.0
  %1973 = vmatpush.msra.mxu0 0.0
  %1974 = vmatpush.msra.mxu0 0.0
  %1975 = vmatpush.msra.mxu0 %v1950
  %1976 = vmatpush.msra.mxu0 %v1949
  %1977 = vmatpush.msra.mxu0 %v1948
  %1978 = vmatpush.msra.mxu0 %v1947
  %1979 = vmatmul.f32.gmra.mxu0 %v1961
  %v1980 = vpop.f32.mrf.mxu0
  %v1981 = vadd.f32 %v1958, %v1980
  %1982 = vdwg.mxu0
  %v1983 = vmax.f32 %v1981, 0.0
  %v1985 = vperm.slane %v1956, 0
  %v1988 = vsel %vm133, %v1983, 0
  %1990 = vmatpush.msra.mxu0 0.0
  %1991 = vmatpush.msra.mxu0 0.0
  %1992 = vmatpush.msra.mxu0 0.0
  %1993 = vmatpush.msra.mxu0 0.0
  %1994 = vmatpush.msra.mxu0 0.0
  %1995 = vmatpush.msra.mxu0 0.0
  %1996 = vmatpush.msra.mxu0 0.0
  %1997 = vmatpush.msra.mxu0 0.0
  %1998 = vmatpush.msra.mxu0 0.0
  %1999 = vmatpush.msra.mxu0 0.0
  %2000 = vmatpush.msra.mxu0 0.0
  %2001 = vmatpush.msra.mxu0 0.0
  %2002 = vmatpush.msra.mxu0 %v1954
  %2003 = vmatpush.msra.mxu0 %v1953
  %2004 = vmatpush.msra.mxu0 %v1952
  %2005 = vmatpush.msra.mxu0 %v1951
  %2006 = vmatmul.f32.gmra.mxu0 %v1988
  %v2007 = vpop.f32.mrf.mxu0
  %v2008 = vadd.f32 %v1985, %v2007
  %2009 = vdwg.mxu0
  %v2010 = vmax.f32 %v2008, 0.0
  %v2011 = vld [vmem:[%s13] sm:$0xff]
  %v2012 = vld [vmem:[%s13 + $0x8] sm:$0xff]
  %v2013 = vld [vmem:[%s13 + $0x10] sm:$0xff]
  %v2014 = vld [vmem:[%s13 + $0x18] sm:$0xff]
  %v2015 = vld [vmem:[%s14] sm:$0x1]
  %v2017 = vperm.slane %v2015, 0
  %v2020 = vsel %vm133, %v2010, 0
  %2022 = vmatpush.msra.mxu0 0.0
  %2023 = vmatpush.msra.mxu0 0.0
  %2024 = vmatpush.msra.mxu0 0.0
  %2025 = vmatpush.msra.mxu0 0.0
  %2026 = vmatpush.msra.mxu0 0.0
  %2027 = vmatpush.msra.mxu0 0.0
  %2028 = vmatpush.msra.mxu0 0.0
  %2029 = vmatpush.msra.mxu0 0.0
  %2030 = vmatpush.msra.mxu0 0.0
  %2031 = vmatpush.msra.mxu0 0.0
  %2032 = vmatpush.msra.mxu0 0.0
  %2033 = vmatpush.msra.mxu0 0.0
  %2034 = vmatpush.msra.mxu0 %v2014
  %2035 = vmatpush.msra.mxu0 %v2013
  %2036 = vmatpush.msra.mxu0 %v2012
  %2037 = vmatpush.msra.mxu0 %v2011
  %2038 = vmatmul.f32.gmra.mxu0 %v2020
  %v2039 = vpop.f32.mrf.mxu0
  %v2040 = vadd.f32 %v2017, %v2039
  %2041 = vdwg.mxu0
  %2042 = vst [vmem:[%s15] sm:$0x3] %v2040
  // Predicated region
  $region62: #{attn_encoder_snli.1} parent=0 // pred_check
    _
  $region63: #{attn_encoder_snli.1} parent=0 // pred_check_branch
    %2044 = sbr.rel (0) target = $region65
  $region64: #{attn_encoder_snli.1} parent=0 // pred_region
    _
  $region65: #{attn_encoder_snli.1} parent=0 // pred_fallthru
    _
  // Predicated region
  $region66: #{attn_encoder_snli.1} parent=0 // pred_check
    _
  $region67: #{attn_encoder_snli.1} parent=0 // pred_check_branch
    %2046 = sbr.rel (0) target = $region69
  $region68: #{attn_encoder_snli.1} parent=0 // pred_region
    _
  $region69: #{attn_encoder_snli.1} parent=0 // pred_fallthru
    _

</llo_original>
